<compile_context>
chip_gen: v6e
topology: v6e:2x2x1
jax: 0.10.0
libtpu: 0.0.40
codegen_flags: <defaults>
</compile_context>

<pallas_src>
from functools import partial

import jax
import jax.numpy as jnp
import numpy as np
from jax.experimental import pallas as pl
from jax.experimental.pallas import tpu as pltpu

EPS = 1e-12          # F.normalize default eps
INV_EPS = 1.0 / EPS


def _attn_block_kernel(xr_ref, gn_ref, wq_ref, wk_ref, wv_ref, gq_ref, gk_ref,
                       wp_ref, bp_ref, o_ref, k_scr, v_scr, *, num_heads, tq):
    """One (batch, q_tile) grid step.

    xr_ref : (1, HW, C)   f32   all spatial rows of this batch element
    gn_ref : (1, C)       f32   g_norm * sqrt(C)
    wq_ref : (H, C, Dp)   f32   per-head q weights (head_dim zero-padded to Dp)
    wk_ref : (H, C, Dp)   f32   per-head k weights (zero pads)
    wv_ref : (H, C, Dp)   bf16  per-head v weights (zero pads)
    gq_ref : (1, Dp)      f32   g_q * sqrt(head_dim) * C**-0.5   (zero in pad lanes)
    gk_ref : (1, Dp)      f32   g_k * sqrt(head_dim)             (zero in pad lanes)
    wp_ref : (H, Dp, C)   bf16  per-head proj weights (zero pad rows)
    bp_ref : (1, C)       f32   proj bias
    o_ref  : (1, TQ, C)   f32   output tile (x + attn)
    k_scr  : (H, HW, Dp)  f32   normalized, gk-scaled K scratch (per batch element)
    v_scr  : (H, HW, Dp)  bf16  V scratch (per batch element)
    """
    qt = pl.program_id(1)

    def rmsnorm(rows):
        # F.normalize(rows, dim=channel) * g_norm * sqrt(C), in f32.
        ss = jnp.sum(rows * rows, axis=-1, keepdims=True)
        inv = jnp.minimum(jax.lax.rsqrt(ss), INV_EPS)          # == 1 / max(sqrt(ss), EPS)
        return rows * inv * gn_ref[...]

    # ---- once per batch element: build normalized K (f32) and V (bf16) for all rows ------
    @pl.when(qt == 0)
    def _():
        xn = rmsnorm(xr_ref[0])                                # (HW, C) f32
        xn_bf = xn.astype(jnp.bfloat16)
        k_ss = None
        for h in range(num_heads):                             # stream heads: one f32 (HW, Dp) live
            kh = jnp.dot(xn, wk_ref[h], preferred_element_type=jnp.float32)
            k_scr[h] = kh                                      # unnormalized for now
            v_scr[h] = jnp.dot(xn_bf, wv_ref[h],
                               preferred_element_type=jnp.float32).astype(jnp.bfloat16)
            k_ss = kh * kh if k_ss is None else k_ss + kh * kh
        # RMSNorm over the *heads* axis (F.normalize(k, dim=1)); sqrt(head_dim) folded in g_k.
        k_mul = jnp.minimum(jax.lax.rsqrt(k_ss), INV_EPS) * gk_ref[...]
        for h in range(num_heads):
            k_scr[h] = k_scr[h] * k_mul                        # rescale in place

    # ---- current query tile ----------------------------------------------------------------
    row0 = qt * tq
    if tq % 8 == 0:
        row0 = pl.multiple_of(row0, 8)
    x_t = xr_ref[0, pl.ds(row0, tq), :]                        # (TQ, C) f32
    xn_t = rmsnorm(x_t)
    q_h = [jnp.dot(xn_t, wq_ref[h], preferred_element_type=jnp.float32)
           for h in range(num_heads)]                          # (TQ, Dp) f32
    q_ss = q_h[0] * q_h[0]
    for h in range(1, num_heads):
        q_ss = q_ss + q_h[h] * q_h[h]
    # sqrt(head_dim) and the SDPA scale C**-0.5 are folded into g_q (applied post-normalize).
    q_mul = jnp.minimum(jax.lax.rsqrt(q_ss), INV_EPS) * gq_ref[...]

    acc = jnp.zeros(x_t.shape, jnp.float32)                    # (TQ, C)
    for h in range(num_heads):
        qh = q_h[h] * q_mul                                    # f32 (TQ, Dp)
        s = jax.lax.dot_general(qh, k_scr[h],
                                dimension_numbers=(((1,), (1,)), ((), ())),
                                preferred_element_type=jnp.float32)      # (TQ, HW) f32
        m = jnp.max(s, axis=-1, keepdims=True)
        p = jnp.exp(s - m)                                     # unnormalized probabilities
        l = jnp.sum(p, axis=-1, keepdims=True)
        oh = jnp.dot(p.astype(jnp.bfloat16), v_scr[h],
                     preferred_element_type=jnp.float32)       # (TQ, Dp)
        oh = oh * pl.reciprocal(l, approx=True)                # deferred softmax normalization
        # Fused "concat heads + 1x1 proj": accumulate the per-head projection directly.
        acc = acc + jnp.dot(oh.astype(jnp.bfloat16), wp_ref[h],
                            preferred_element_type=jnp.float32)          # (TQ, C)

    o_ref[0] = (x_t + acc + bp_ref[...]).astype(o_ref.dtype)


def _vmem_cap_bytes():
    """Per-generation VMEM ceiling (~85% of physical), with a conservative fallback."""
    try:
        info = pltpu.get_tpu_info()
        return int(info.vmem_capacity_bytes * 0.85)
    except Exception:
        return 48 * 1024 * 1024


def _pick_q_tile(hw, tile_budget_bytes, max_tile=512):
    """Largest multiple-of-8 divisor of hw whose score working set fits the budget."""
    cap = max(8, int(tile_budget_bytes) // (hw * 8))           # ~ f32 scores + bf16 probs / row
    cap = min(cap, max_tile, hw)
    for t in range(cap, 0, -1):
        if hw % t == 0 and t % 8 == 0:
            return t
    return hw                                                  # full block is always layout-legal


def _prepare_params(params, C, num_heads):
    """Fold constants, reorganize weights per head, pad head_dim to a multiple of 128."""
    hd = C // num_heads
    hd_pad = ((hd + 127) // 128) * 128
    pad = hd_pad - hd

    gn = params["g_norm"].reshape(1, C).astype(jnp.float32) * (C ** 0.5)
    w_qkv_t = params["w_qkv_t"].astype(jnp.float32)            # (C, 3C), cols ordered (q|k|v), (h, d)

    def per_head(w, dtype):                                    # (C, C) -> (H, C, Dp)
        w = w.reshape(C, num_heads, hd).transpose(1, 0, 2)
        w = jnp.pad(w, ((0, 0), (0, 0), (0, pad)))
        return w.astype(dtype)

    wq = per_head(w_qkv_t[:, 0:C], jnp.float32)                # f32: logit path is precision-critical
    wk = per_head(w_qkv_t[:, C:2 * C], jnp.float32)
    wv = per_head(w_qkv_t[:, 2 * C:3 * C], jnp.bfloat16)       # bf16: value path

    # fold sqrt(head_dim) into both gains and the SDPA scale (C**-0.5) into g_q (post-norm).
    gq = jnp.pad(params["g_q"].reshape(1, hd).astype(jnp.float32)
                 * (hd ** 0.5) * (C ** -0.5), ((0, 0), (0, pad)))
    gk = jnp.pad(params["g_k"].reshape(1, hd).astype(jnp.float32)
                 * (hd ** 0.5), ((0, 0), (0, pad)))

    wp = params["w_proj_t"].astype(jnp.float32).reshape(num_heads, hd, C)  # rows ordered (h, d)
    wp = jnp.pad(wp, ((0, 0), (0, pad), (0, 0))).astype(jnp.bfloat16)

    bp = params["b_proj"].reshape(1, C).astype(jnp.float32)
    return gn, wq, wk, wv, gq, gk, wp, bp


def attn_block_pallas(x_nchw, params, num_heads):
    B, C, H, W = x_nchw.shape
    HW = H * W
    gn, wq, wk, wv, gq, gk, wp, bp = _prepare_params(params, C, num_heads)
    hd_pad = wq.shape[-1]

    x_rows = jnp.transpose(x_nchw, (0, 2, 3, 1)).reshape(B, HW, C)         # (B, HW, C)

    vmem_cap = _vmem_cap_bytes()
    tq = _pick_q_tile(HW, vmem_cap // 4)
    n_qt = HW // tq

    kernel = partial(_attn_block_kernel, num_heads=num_heads, tq=tq)

    def const_spec(arr):
        nd = arr.ndim
        return pl.BlockSpec(arr.shape, lambda b, q, _nd=nd: (0,) * _nd)

    # VMEM footprint estimate (blocks are double-buffered by the auto-pipeliner).
    weight_bytes = sum(int(a.size) * a.dtype.itemsize
                       for a in (gn, wq, wk, wv, gq, gk, wp, bp))
    needed = (
        2 * HW * C * 4                                     # x full-row block
        + 2 * 2 * tq * C * 4                               # output tile block
        + 2 * weight_bytes                                 # weight blocks
        + num_heads * HW * hd_pad * (4 + 2)                # K (f32) + V (bf16) scratch
        + HW * C * 6 + 2 * HW * hd_pad * 4                 # K/V-build transients (xn, kh, k_ss)
        + tq * HW * 6                                      # f32 scores + bf16 probs per head
        + (num_heads + 2) * tq * hd_pad * 4 + 2 * tq * C * 4
    )
    vmem_limit = int(min(max(needed * 5 // 4, 32 * 1024 * 1024), vmem_cap))

    # NOTE: batch-constant blocks (x rows, weights) still use the default double-buffered
    # pipeline; pl.Buffered(1) / manual single-buffering and a flash-style KV chunking for
    # very large HW are the next VMEM levers (kept off the proven compile path here).
    out_flat = pl.pallas_call(
        kernel,
        out_shape=jax.ShapeDtypeStruct((B, HW, C), x_rows.dtype),
        grid=(B, n_qt),
        in_specs=[
            pl.BlockSpec((1, HW, C), lambda b, q: (b, 0, 0)),   # x: full rows, fetched once per b
            const_spec(gn), const_spec(wq), const_spec(wk), const_spec(wv),
            const_spec(gq), const_spec(gk), const_spec(wp), const_spec(bp),
        ],
        out_specs=pl.BlockSpec((1, tq, C), lambda b, q: (b, q, 0)),
        scratch_shapes=[
            pltpu.VMEM((num_heads, HW, hd_pad), jnp.float32),   # normalized, g-scaled K
            pltpu.VMEM((num_heads, HW, hd_pad), jnp.bfloat16),  # V
        ],
        compiler_params=pltpu.CompilerParams(
            dimension_semantics=("parallel", "arbitrary"),
            vmem_limit_bytes=vmem_limit,
        ),
    )(x_rows, gn, wq, wk, wv, gq, gk, wp, bp)

    return jnp.transpose(out_flat.reshape(B, H, W, C), (0, 3, 1, 2))        # back to NCHW


def attn_block_ref(x, params, num_heads):
    """Pure-JAX f32 reference mirroring the PyTorch forward exactly (NCHW)."""
    B, C, H, W = x.shape
    head_dim = C // num_heads
    HW = H * W
    hp = jax.lax.Precision.HIGHEST

    # RMSNorm2d
    nrm = jnp.sqrt(jnp.sum(x * x, axis=1, keepdims=True))
    x_n = x / jnp.maximum(nrm, EPS) * params["g_norm"].reshape(1, C, 1, 1) * (C ** 0.5)

    # qkv 1x1 conv (bias-free)
    w_qkv = params["w_qkv_t"].T                                             # (3C, C)
    qkv = jnp.einsum("oc,bchw->bohw", w_qkv, x_n, precision=hp)
    q, k, v = qkv[:, :C], qkv[:, C:2 * C], qkv[:, 2 * C:]

    def to_heads(t):  # 'b (h c) x y -> b h (x y) c'
        t = t.reshape(B, num_heads, head_dim, H, W)
        return jnp.transpose(t, (0, 1, 3, 4, 2)).reshape(B, num_heads, HW, head_dim)

    q, k, v = map(to_heads, (q, k, v))

    def rms_over_heads(t, g):  # F.normalize(t, dim=1) * g * sqrt(head_dim)
        den = jnp.maximum(jnp.sqrt(jnp.sum(t * t, axis=1, keepdims=True)), EPS)
        return t / den * g.reshape(1, 1, 1, head_dim) * (head_dim ** 0.5)

    q = rms_over_heads(q, params["g_q"])
    k = rms_over_heads(k, params["g_k"])

    s = jnp.einsum("bhqd,bhkd->bhqk", q, k, precision=hp) * (C ** (-0.5))
    p = jax.nn.softmax(s, axis=-1)
    out = jnp.einsum("bhqk,bhkd->bhqd", p, v, precision=hp)                 # (B, h, HW, hd)

    # 'b h (x y) c -> b (h c) x y'
    out = jnp.transpose(out, (0, 1, 3, 2)).reshape(B, C, H, W)

    w_p = params["w_proj_t"].T                                              # (C, C)
    out = jnp.einsum("oc,bchw->bohw", w_p, out, precision=hp) \
        + params["b_proj"].reshape(1, C, 1, 1)
    return x + out


if __name__ == "__main__":
    B, C, H, W = 2, 128, 8, 8
    num_heads = max(1, C // 64)          # = 2
    head_dim = C // num_heads            # = 64

    key = jax.random.PRNGKey(0)
    kx, k1, k2, k3, k4, k5, k6 = jax.random.split(key, 7)

    x = jax.random.normal(kx, (B, C, H, W), jnp.float32)

    params = {
        "g_norm":  1.0 + 0.1 * jax.random.normal(k1, (1, C), jnp.float32),
        "w_qkv_t": jax.random.normal(k2, (C, 3 * C), jnp.float32) * (C ** -0.5),
        # g_q / g_k around 0.25 keeps the attention logits in a realistic, non-saturated range
        # so the mixed-precision kernel vs f32 reference comparison is meaningful.
        "g_q":     0.25 + 0.025 * jax.random.normal(k3, (1, head_dim), jnp.float32),
        "g_k":     0.25 + 0.025 * jax.random.normal(k4, (1, head_dim), jnp.float32),
        "w_proj_t": jax.random.normal(k5, (C, C), jnp.float32) * (C ** -0.5),
        "b_proj":  0.1 * jax.random.normal(k6, (1, C), jnp.float32),
    }

    out = jax.block_until_ready(attn_block_pallas(x, params, num_heads))
    ref = jax.block_until_ready(attn_block_ref(x, params, num_heads))

    assert out.shape == (B, C, H, W) and out.dtype == jnp.float32

    out_np, ref_np = np.asarray(out), np.asarray(ref)
    err = np.abs(out_np - ref_np)
    # Two-tier check sized for a mixed-precision kernel: the f32 Q/K/logit path keeps the
    # bulk of the error tiny (tight mean bound), while the bf16 V / probability / projection
    # stages bound the worst case at softmax-sensitive query rows (loose pointwise bound).
    assert float(err.mean()) < 1e-2, f"mean abs err too large: {err.mean():.3e}"
    np.testing.assert_allclose(out_np, ref_np, atol=1e-1, rtol=1e-1)

    print("KERNEL_OK")
</pallas_src>

<mosaic_0001>
module attributes {stable_mosaic.version = 11 : i64} {
  func.func @_attn_block_kernel(%arg0: i32, %arg1: i32, %arg2: memref<1x64x128xf32, #tpu.memory_space<vmem>>, %arg3: memref<1x128xf32, #tpu.memory_space<vmem>>, %arg4: memref<2x128x128xf32, #tpu.memory_space<vmem>>, %arg5: memref<2x128x128xf32, #tpu.memory_space<vmem>>, %arg6: memref<2x128x128xbf16, #tpu.memory_space<vmem>>, %arg7: memref<1x128xf32, #tpu.memory_space<vmem>>, %arg8: memref<1x128xf32, #tpu.memory_space<vmem>>, %arg9: memref<2x128x128xbf16, #tpu.memory_space<vmem>>, %arg10: memref<1x128xf32, #tpu.memory_space<vmem>>, %arg11: memref<1x64x128xf32, #tpu.memory_space<vmem>>, %arg12: memref<2x64x128xf32, #tpu.memory_space<vmem>>, %arg13: memref<2x64x128xbf16, #tpu.memory_space<vmem>>) attributes {dimension_semantics = [#tpu.dimension_semantics<parallel>, #tpu.dimension_semantics<arbitrary>], iteration_bounds = array<i64: 2, 1>, scalar_prefetch = 0 : i64, scratch_operands = 2 : i64, tpu.core_type = #tpu.core_type<tc>, window_params = [{transform_indices = @transform_0, window_bounds = array<i64: 1, 64, 128>}, {pipeline_mode = #tpu.pipeline_mode<synchronous>, transform_indices = @transform_1, window_bounds = array<i64: 1, 128>}, {pipeline_mode = #tpu.pipeline_mode<synchronous>, transform_indices = @transform_2, window_bounds = array<i64: 2, 128, 128>}, {pipeline_mode = #tpu.pipeline_mode<synchronous>, transform_indices = @transform_3, window_bounds = array<i64: 2, 128, 128>}, {pipeline_mode = #tpu.pipeline_mode<synchronous>, transform_indices = @transform_4, window_bounds = array<i64: 2, 128, 128>}, {pipeline_mode = #tpu.pipeline_mode<synchronous>, transform_indices = @transform_5, window_bounds = array<i64: 1, 128>}, {pipeline_mode = #tpu.pipeline_mode<synchronous>, transform_indices = @transform_6, window_bounds = array<i64: 1, 128>}, {pipeline_mode = #tpu.pipeline_mode<synchronous>, transform_indices = @transform_7, window_bounds = array<i64: 2, 128, 128>}, {pipeline_mode = #tpu.pipeline_mode<synchronous>, transform_indices = @transform_8, window_bounds = array<i64: 1, 128>}, {transform_indices = @transform_9, window_bounds = array<i64: 1, 64, 128>}]} {
    %c0_i32 = arith.constant 0 : i32
    %0 = arith.cmpi eq, %arg1, %c0_i32 : i32
    %1 = arith.extui %0 : i1 to i32
    %c0_i32_0 = arith.constant 0 : i32
    %2 = arith.cmpi ne, %1, %c0_i32_0 : i32
    scf.if %2 {
      %c0_49 = arith.constant 0 : index
      %c0_50 = arith.constant 0 : index
      %c0_51 = arith.constant 0 : index
      %88 = vector.load %arg2[%c0_49, %c0_50, %c0_51] : memref<1x64x128xf32, #tpu.memory_space<vmem>>, vector<1x64x128xf32>
      %89 = vector.shape_cast %88 : vector<1x64x128xf32> to vector<64x128xf32>
      %90 = arith.mulf %89, %89 : vector<64x128xf32>
      %cst_52 = arith.constant dense<0.000000e+00> : vector<64xf32>
      %91 = vector.multi_reduction <add>, %90, %cst_52 [1] : vector<64x128xf32> to vector<64xf32>
      %92 = vector.shape_cast %91 : vector<64xf32> to vector<64x1xf32>
      %93 = math.rsqrt %92 : vector<64x1xf32>
      %cst_53 = arith.constant 9.99999995E+11 : f32
      %94 = vector.broadcast %cst_53 : f32 to vector<64x1xf32>
      %95 = arith.minimumf %93, %94 : vector<64x1xf32>
      %96 = vector.broadcast %95 : vector<64x1xf32> to vector<64x128xf32>
      %97 = arith.mulf %89, %96 : vector<64x128xf32>
      %c0_54 = arith.constant 0 : index
      %c0_55 = arith.constant 0 : index
      %98 = vector.load %arg3[%c0_54, %c0_55] : memref<1x128xf32, #tpu.memory_space<vmem>>, vector<1x128xf32>
      %99 = vector.broadcast %98 : vector<1x128xf32> to vector<64x128xf32>
      %100 = arith.mulf %97, %99 : vector<64x128xf32>
      %101 = arith.truncf %100 : vector<64x128xf32> to vector<64x128xbf16>
      %c0_56 = arith.constant 0 : index
      %c0_57 = arith.constant 0 : index
      %c0_58 = arith.constant 0 : index
      %102 = vector.load %arg5[%c0_56, %c0_57, %c0_58] : memref<2x128x128xf32, #tpu.memory_space<vmem>>, vector<1x128x128xf32>
      %103 = vector.shape_cast %102 : vector<1x128x128xf32> to vector<128x128xf32>
      %cst_59 = arith.constant dense<0.000000e+00> : vector<64x128xf32>
      %104 = tpu.matmul %100, %103, %cst_59 {dimension_numbers = #tpu.dot_dimension_numbers<[1], [0], [0], [1], [0, 0, 1, 1], [], []>} : vector<64x128xf32>, vector<128x128xf32>, vector<64x128xf32> -> vector<64x128xf32>
      %c0_60 = arith.constant 0 : index
      %c0_61 = arith.constant 0 : index
      %c0_62 = arith.constant 0 : index
      %105 = vector.load %arg12[%c0_60, %c0_61, %c0_62] : memref<2x64x128xf32, #tpu.memory_space<vmem>>, vector<1x64x128xf32>
      %106 = vector.shape_cast %105 : vector<1x64x128xf32> to vector<64x128xf32>
      %107 = vector.shape_cast %104 : vector<64x128xf32> to vector<1x64x128xf32>
      tpu.vector_store %arg12[%c0_60, %c0_61, %c0_62], %107 {strides = array<i32>} : memref<2x64x128xf32, #tpu.memory_space<vmem>>, vector<1x64x128xf32>,
      %c0_63 = arith.constant 0 : index
      %c0_64 = arith.constant 0 : index
      %c0_65 = arith.constant 0 : index
      %108 = vector.load %arg6[%c0_63, %c0_64, %c0_65] : memref<2x128x128xbf16, #tpu.memory_space<vmem>>, vector<1x128x128xbf16>
      %109 = vector.shape_cast %108 : vector<1x128x128xbf16> to vector<128x128xbf16>
      %cst_66 = arith.constant dense<0.000000e+00> : vector<64x128xf32>
      %110 = tpu.matmul %101, %109, %cst_66 {dimension_numbers = #tpu.dot_dimension_numbers<[1], [0], [0], [1], [0, 0, 1, 1], [], []>} : vector<64x128xbf16>, vector<128x128xbf16>, vector<64x128xf32> -> vector<64x128xf32>
      %111 = arith.truncf %110 : vector<64x128xf32> to vector<64x128xbf16>
      %c0_67 = arith.constant 0 : index
      %c0_68 = arith.constant 0 : index
      %c0_69 = arith.constant 0 : index
      %112 = vector.load %arg13[%c0_67, %c0_68, %c0_69] : memref<2x64x128xbf16, #tpu.memory_space<vmem>>, vector<1x64x128xbf16>
      %113 = vector.shape_cast %112 : vector<1x64x128xbf16> to vector<64x128xbf16>
      %114 = vector.shape_cast %111 : vector<64x128xbf16> to vector<1x64x128xbf16>
      tpu.vector_store %arg13[%c0_67, %c0_68, %c0_69], %114 {strides = array<i32>} : memref<2x64x128xbf16, #tpu.memory_space<vmem>>, vector<1x64x128xbf16>,
      %115 = arith.mulf %104, %104 : vector<64x128xf32>
      %c1_70 = arith.constant 1 : index
      %c0_71 = arith.constant 0 : index
      %c0_72 = arith.constant 0 : index
      %116 = vector.load %arg5[%c1_70, %c0_71, %c0_72] : memref<2x128x128xf32, #tpu.memory_space<vmem>>, vector<1x128x128xf32>
      %117 = vector.shape_cast %116 : vector<1x128x128xf32> to vector<128x128xf32>
      %cst_73 = arith.constant dense<0.000000e+00> : vector<64x128xf32>
      %118 = tpu.matmul %100, %117, %cst_73 {dimension_numbers = #tpu.dot_dimension_numbers<[1], [0], [0], [1], [0, 0, 1, 1], [], []>} : vector<64x128xf32>, vector<128x128xf32>, vector<64x128xf32> -> vector<64x128xf32>
      %c1_74 = arith.constant 1 : index
      %c0_75 = arith.constant 0 : index
      %c0_76 = arith.constant 0 : index
      %119 = vector.load %arg12[%c1_74, %c0_75, %c0_76] : memref<2x64x128xf32, #tpu.memory_space<vmem>>, vector<1x64x128xf32>
      %120 = vector.shape_cast %119 : vector<1x64x128xf32> to vector<64x128xf32>
      %121 = vector.shape_cast %118 : vector<64x128xf32> to vector<1x64x128xf32>
      tpu.vector_store %arg12[%c1_74, %c0_75, %c0_76], %121 {strides = array<i32>} : memref<2x64x128xf32, #tpu.memory_space<vmem>>, vector<1x64x128xf32>,
      %c1_77 = arith.constant 1 : index
      %c0_78 = arith.constant 0 : index
      %c0_79 = arith.constant 0 : index
      %122 = vector.load %arg6[%c1_77, %c0_78, %c0_79] : memref<2x128x128xbf16, #tpu.memory_space<vmem>>, vector<1x128x128xbf16>
      %123 = vector.shape_cast %122 : vector<1x128x128xbf16> to vector<128x128xbf16>
      %cst_80 = arith.constant dense<0.000000e+00> : vector<64x128xf32>
      %124 = tpu.matmul %101, %123, %cst_80 {dimension_numbers = #tpu.dot_dimension_numbers<[1], [0], [0], [1], [0, 0, 1, 1], [], []>} : vector<64x128xbf16>, vector<128x128xbf16>, vector<64x128xf32> -> vector<64x128xf32>
      %125 = arith.truncf %124 : vector<64x128xf32> to vector<64x128xbf16>
      %c1_81 = arith.constant 1 : index
      %c0_82 = arith.constant 0 : index
      %c0_83 = arith.constant 0 : index
      %126 = vector.load %arg13[%c1_81, %c0_82, %c0_83] : memref<2x64x128xbf16, #tpu.memory_space<vmem>>, vector<1x64x128xbf16>
      %127 = vector.shape_cast %126 : vector<1x64x128xbf16> to vector<64x128xbf16>
      %128 = vector.shape_cast %125 : vector<64x128xbf16> to vector<1x64x128xbf16>
      tpu.vector_store %arg13[%c1_81, %c0_82, %c0_83], %128 {strides = array<i32>} : memref<2x64x128xbf16, #tpu.memory_space<vmem>>, vector<1x64x128xbf16>,
      %129 = arith.mulf %118, %118 : vector<64x128xf32>
      %130 = arith.addf %115, %129 : vector<64x128xf32>
      %131 = math.rsqrt %130 : vector<64x128xf32>
      %cst_84 = arith.constant 9.99999995E+11 : f32
      %132 = vector.broadcast %cst_84 : f32 to vector<64x128xf32>
      %133 = arith.minimumf %131, %132 : vector<64x128xf32>
      %c0_85 = arith.constant 0 : index
      %c0_86 = arith.constant 0 : index
      %134 = vector.load %arg8[%c0_85, %c0_86] : memref<1x128xf32, #tpu.memory_space<vmem>>, vector<1x128xf32>
      %135 = vector.broadcast %134 : vector<1x128xf32> to vector<64x128xf32>
      %136 = arith.mulf %133, %135 : vector<64x128xf32>
      %c0_87 = arith.constant 0 : index
      %c0_88 = arith.constant 0 : index
      %c0_89 = arith.constant 0 : index
      %137 = vector.load %arg12[%c0_87, %c0_88, %c0_89] : memref<2x64x128xf32, #tpu.memory_space<vmem>>, vector<1x64x128xf32>
      %138 = vector.shape_cast %137 : vector<1x64x128xf32> to vector<64x128xf32>
      %139 = arith.mulf %138, %136 : vector<64x128xf32>
      %c0_90 = arith.constant 0 : index
      %c0_91 = arith.constant 0 : index
      %c0_92 = arith.constant 0 : index
      %140 = vector.load %arg12[%c0_90, %c0_91, %c0_92] : memref<2x64x128xf32, #tpu.memory_space<vmem>>, vector<1x64x128xf32>
      %141 = vector.shape_cast %140 : vector<1x64x128xf32> to vector<64x128xf32>
      %142 = vector.shape_cast %139 : vector<64x128xf32> to vector<1x64x128xf32>
      tpu.vector_store %arg12[%c0_90, %c0_91, %c0_92], %142 {strides = array<i32>} : memref<2x64x128xf32, #tpu.memory_space<vmem>>, vector<1x64x128xf32>,
      %c1_93 = arith.constant 1 : index
      %c0_94 = arith.constant 0 : index
      %c0_95 = arith.constant 0 : index
      %143 = vector.load %arg12[%c1_93, %c0_94, %c0_95] : memref<2x64x128xf32, #tpu.memory_space<vmem>>, vector<1x64x128xf32>
      %144 = vector.shape_cast %143 : vector<1x64x128xf32> to vector<64x128xf32>
      %145 = arith.mulf %144, %136 : vector<64x128xf32>
      %c1_96 = arith.constant 1 : index
      %c0_97 = arith.constant 0 : index
      %c0_98 = arith.constant 0 : index
      %146 = vector.load %arg12[%c1_96, %c0_97, %c0_98] : memref<2x64x128xf32, #tpu.memory_space<vmem>>, vector<1x64x128xf32>
      %147 = vector.shape_cast %146 : vector<1x64x128xf32> to vector<64x128xf32>
      %148 = vector.shape_cast %145 : vector<64x128xf32> to vector<1x64x128xf32>
      tpu.vector_store %arg12[%c1_96, %c0_97, %c0_98], %148 {strides = array<i32>} : memref<2x64x128xf32, #tpu.memory_space<vmem>>, vector<1x64x128xf32>,
    } else {
    }
    %c64_i32 = arith.constant 64 : i32
    %3 = arith.muli %arg1, %c64_i32 : i32
    %4 = tpu.assume_multiple %3, 8 : i32
    %c0 = arith.constant 0 : index
    %5 = arith.index_cast %4 : i32 to index
    %c0_1 = arith.constant 0 : index
    %6 = vector.load %arg2[%c0, %5, %c0_1] : memref<1x64x128xf32, #tpu.memory_space<vmem>>, vector<1x64x128xf32>
    %7 = vector.shape_cast %6 : vector<1x64x128xf32> to vector<64x128xf32>
    %8 = arith.mulf %7, %7 : vector<64x128xf32>
    %cst = arith.constant dense<0.000000e+00> : vector<64xf32>
    %9 = vector.multi_reduction <add>, %8, %cst [1] : vector<64x128xf32> to vector<64xf32>
    %10 = vector.shape_cast %9 : vector<64xf32> to vector<64x1xf32>
    %11 = math.rsqrt %10 : vector<64x1xf32>
    %cst_2 = arith.constant 9.99999995E+11 : f32
    %12 = vector.broadcast %cst_2 : f32 to vector<64x1xf32>
    %13 = arith.minimumf %11, %12 : vector<64x1xf32>
    %14 = vector.broadcast %13 : vector<64x1xf32> to vector<64x128xf32>
    %15 = arith.mulf %7, %14 : vector<64x128xf32>
    %c0_3 = arith.constant 0 : index
    %c0_4 = arith.constant 0 : index
    %16 = vector.load %arg3[%c0_3, %c0_4] : memref<1x128xf32, #tpu.memory_space<vmem>>, vector<1x128xf32>
    %17 = vector.broadcast %16 : vector<1x128xf32> to vector<64x128xf32>
    %18 = arith.mulf %15, %17 : vector<64x128xf32>
    %c0_5 = arith.constant 0 : index
    %c0_6 = arith.constant 0 : index
    %c0_7 = arith.constant 0 : index
    %19 = vector.load %arg4[%c0_5, %c0_6, %c0_7] : memref<2x128x128xf32, #tpu.memory_space<vmem>>, vector<1x128x128xf32>
    %20 = vector.shape_cast %19 : vector<1x128x128xf32> to vector<128x128xf32>
    %cst_8 = arith.constant dense<0.000000e+00> : vector<64x128xf32>
    %21 = tpu.matmul %18, %20, %cst_8 {dimension_numbers = #tpu.dot_dimension_numbers<[1], [0], [0], [1], [0, 0, 1, 1], [], []>} : vector<64x128xf32>, vector<128x128xf32>, vector<64x128xf32> -> vector<64x128xf32>
    %c1 = arith.constant 1 : index
    %c0_9 = arith.constant 0 : index
    %c0_10 = arith.constant 0 : index
    %22 = vector.load %arg4[%c1, %c0_9, %c0_10] : memref<2x128x128xf32, #tpu.memory_space<vmem>>, vector<1x128x128xf32>
    %23 = vector.shape_cast %22 : vector<1x128x128xf32> to vector<128x128xf32>
    %cst_11 = arith.constant dense<0.000000e+00> : vector<64x128xf32>
    %24 = tpu.matmul %18, %23, %cst_11 {dimension_numbers = #tpu.dot_dimension_numbers<[1], [0], [0], [1], [0, 0, 1, 1], [], []>} : vector<64x128xf32>, vector<128x128xf32>, vector<64x128xf32> -> vector<64x128xf32>
    %25 = arith.mulf %21, %21 : vector<64x128xf32>
    %26 = arith.mulf %24, %24 : vector<64x128xf32>
    %27 = arith.addf %25, %26 : vector<64x128xf32>
    %28 = math.rsqrt %27 : vector<64x128xf32>
    %cst_12 = arith.constant 9.99999995E+11 : f32
    %29 = vector.broadcast %cst_12 : f32 to vector<64x128xf32>
    %30 = arith.minimumf %28, %29 : vector<64x128xf32>
    %c0_13 = arith.constant 0 : index
    %c0_14 = arith.constant 0 : index
    %31 = vector.load %arg7[%c0_13, %c0_14] : memref<1x128xf32, #tpu.memory_space<vmem>>, vector<1x128xf32>
    %32 = vector.broadcast %31 : vector<1x128xf32> to vector<64x128xf32>
    %33 = arith.mulf %30, %32 : vector<64x128xf32>
    %cst_15 = arith.constant 0.000000e+00 : f32
    %34 = vector.broadcast %cst_15 : f32 to vector<64x128xf32>
    %35 = arith.mulf %21, %33 : vector<64x128xf32>
    %c0_16 = arith.constant 0 : index
    %c0_17 = arith.constant 0 : index
    %c0_18 = arith.constant 0 : index
    %36 = vector.load %arg12[%c0_16, %c0_17, %c0_18] : memref<2x64x128xf32, #tpu.memory_space<vmem>>, vector<1x64x128xf32>
    %37 = vector.shape_cast %36 : vector<1x64x128xf32> to vector<64x128xf32>
    %cst_19 = arith.constant dense<0.000000e+00> : vector<64x64xf32>
    %38 = tpu.matmul %35, %37, %cst_19 {dimension_numbers = #tpu.dot_dimension_numbers<[1], [1], [0], [0], [0, 0, 1, 0], [], []>} : vector<64x128xf32>, vector<64x128xf32>, vector<64x64xf32> -> vector<64x64xf32>
    %cst_20 = arith.constant dense<0xFF800000> : vector<64xf32>
    %39 = vector.multi_reduction <maximumf>, %38, %cst_20 [1] : vector<64x64xf32> to vector<64xf32>
    %40 = vector.shape_cast %39 : vector<64xf32> to vector<64x1xf32>
    %41 = vector.broadcast %40 : vector<64x1xf32> to vector<64x64xf32>
    %42 = arith.subf %38, %41 : vector<64x64xf32>
    %43 = math.exp %42 : vector<64x64xf32>
    %cst_21 = arith.constant dense<0.000000e+00> : vector<64xf32>
    %44 = vector.multi_reduction <add>, %43, %cst_21 [1] : vector<64x64xf32> to vector<64xf32>
    %45 = vector.shape_cast %44 : vector<64xf32> to vector<64x1xf32>
    %46 = arith.truncf %43 : vector<64x64xf32> to vector<64x64xbf16>
    %c0_22 = arith.constant 0 : index
    %c0_23 = arith.constant 0 : index
    %c0_24 = arith.constant 0 : index
    %47 = vector.load %arg13[%c0_22, %c0_23, %c0_24] : memref<2x64x128xbf16, #tpu.memory_space<vmem>>, vector<1x64x128xbf16>
    %48 = vector.shape_cast %47 : vector<1x64x128xbf16> to vector<64x128xbf16>
    %cst_25 = arith.constant dense<0.000000e+00> : vector<64x128xf32>
    %49 = tpu.matmul %46, %48, %cst_25 {dimension_numbers = #tpu.dot_dimension_numbers<[1], [0], [0], [1], [0, 0, 1, 1], [], []>} : vector<64x64xbf16>, vector<64x128xbf16>, vector<64x128xf32> -> vector<64x128xf32>
    %50 = tpu.reciprocal %45 {approx = true} : vector<64x1xf32> -> vector<64x1xf32>
    %51 = vector.broadcast %50 : vector<64x1xf32> to vector<64x128xf32>
    %52 = arith.mulf %49, %51 : vector<64x128xf32>
    %53 = arith.truncf %52 : vector<64x128xf32> to vector<64x128xbf16>
    %c0_26 = arith.constant 0 : index
    %c0_27 = arith.constant 0 : index
    %c0_28 = arith.constant 0 : index
    %54 = vector.load %arg9[%c0_26, %c0_27, %c0_28] : memref<2x128x128xbf16, #tpu.memory_space<vmem>>, vector<1x128x128xbf16>
    %55 = vector.shape_cast %54 : vector<1x128x128xbf16> to vector<128x128xbf16>
    %cst_29 = arith.constant dense<0.000000e+00> : vector<64x128xf32>
    %56 = tpu.matmul %53, %55, %cst_29 {dimension_numbers = #tpu.dot_dimension_numbers<[1], [0], [0], [1], [0, 0, 1, 1], [], []>} : vector<64x128xbf16>, vector<128x128xbf16>, vector<64x128xf32> -> vector<64x128xf32>
    %57 = arith.addf %34, %56 : vector<64x128xf32>
    %58 = arith.mulf %24, %33 : vector<64x128xf32>
    %c1_30 = arith.constant 1 : index
    %c0_31 = arith.constant 0 : index
    %c0_32 = arith.constant 0 : index
    %59 = vector.load %arg12[%c1_30, %c0_31, %c0_32] : memref<2x64x128xf32, #tpu.memory_space<vmem>>, vector<1x64x128xf32>
    %60 = vector.shape_cast %59 : vector<1x64x128xf32> to vector<64x128xf32>
    %cst_33 = arith.constant dense<0.000000e+00> : vector<64x64xf32>
    %61 = tpu.matmul %58, %60, %cst_33 {dimension_numbers = #tpu.dot_dimension_numbers<[1], [1], [0], [0], [0, 0, 1, 0], [], []>} : vector<64x128xf32>, vector<64x128xf32>, vector<64x64xf32> -> vector<64x64xf32>
    %cst_34 = arith.constant dense<0xFF800000> : vector<64xf32>
    %62 = vector.multi_reduction <maximumf>, %61, %cst_34 [1] : vector<64x64xf32> to vector<64xf32>
    %63 = vector.shape_cast %62 : vector<64xf32> to vector<64x1xf32>
    %64 = vector.broadcast %63 : vector<64x1xf32> to vector<64x64xf32>
    %65 = arith.subf %61, %64 : vector<64x64xf32>
    %66 = math.exp %65 : vector<64x64xf32>
    %cst_35 = arith.constant dense<0.000000e+00> : vector<64xf32>
    %67 = vector.multi_reduction <add>, %66, %cst_35 [1] : vector<64x64xf32> to vector<64xf32>
    %68 = vector.shape_cast %67 : vector<64xf32> to vector<64x1xf32>
    %69 = arith.truncf %66 : vector<64x64xf32> to vector<64x64xbf16>
    %c1_36 = arith.constant 1 : index
    %c0_37 = arith.constant 0 : index
    %c0_38 = arith.constant 0 : index
    %70 = vector.load %arg13[%c1_36, %c0_37, %c0_38] : memref<2x64x128xbf16, #tpu.memory_space<vmem>>, vector<1x64x128xbf16>
    %71 = vector.shape_cast %70 : vector<1x64x128xbf16> to vector<64x128xbf16>
    %cst_39 = arith.constant dense<0.000000e+00> : vector<64x128xf32>
    %72 = tpu.matmul %69, %71, %cst_39 {dimension_numbers = #tpu.dot_dimension_numbers<[1], [0], [0], [1], [0, 0, 1, 1], [], []>} : vector<64x64xbf16>, vector<64x128xbf16>, vector<64x128xf32> -> vector<64x128xf32>
    %73 = tpu.reciprocal %68 {approx = true} : vector<64x1xf32> -> vector<64x1xf32>
    %74 = vector.broadcast %73 : vector<64x1xf32> to vector<64x128xf32>
    %75 = arith.mulf %72, %74 : vector<64x128xf32>
    %76 = arith.truncf %75 : vector<64x128xf32> to vector<64x128xbf16>
    %c1_40 = arith.constant 1 : index
    %c0_41 = arith.constant 0 : index
    %c0_42 = arith.constant 0 : index
    %77 = vector.load %arg9[%c1_40, %c0_41, %c0_42] : memref<2x128x128xbf16, #tpu.memory_space<vmem>>, vector<1x128x128xbf16>
    %78 = vector.shape_cast %77 : vector<1x128x128xbf16> to vector<128x128xbf16>
    %cst_43 = arith.constant dense<0.000000e+00> : vector<64x128xf32>
    %79 = tpu.matmul %76, %78, %cst_43 {dimension_numbers = #tpu.dot_dimension_numbers<[1], [0], [0], [1], [0, 0, 1, 1], [], []>} : vector<64x128xbf16>, vector<128x128xbf16>, vector<64x128xf32> -> vector<64x128xf32>
    %80 = arith.addf %57, %79 : vector<64x128xf32>
    %81 = arith.addf %7, %80 : vector<64x128xf32>
    %c0_44 = arith.constant 0 : index
    %c0_45 = arith.constant 0 : index
    %82 = vector.load %arg10[%c0_44, %c0_45] : memref<1x128xf32, #tpu.memory_space<vmem>>, vector<1x128xf32>
    %83 = vector.broadcast %82 : vector<1x128xf32> to vector<64x128xf32>
    %84 = arith.addf %81, %83 : vector<64x128xf32>
    %c0_46 = arith.constant 0 : index
    %c0_47 = arith.constant 0 : index
    %c0_48 = arith.constant 0 : index
    %85 = vector.load %arg11[%c0_46, %c0_47, %c0_48] : memref<1x64x128xf32, #tpu.memory_space<vmem>>, vector<1x64x128xf32>
    %86 = vector.shape_cast %85 : vector<1x64x128xf32> to vector<64x128xf32>
    %87 = vector.shape_cast %84 : vector<64x128xf32> to vector<1x64x128xf32>
    tpu.vector_store %arg11[%c0_46, %c0_47, %c0_48], %87 {strides = array<i32>} : memref<1x64x128xf32, #tpu.memory_space<vmem>>, vector<1x64x128xf32>,
    return
  }
  func.func @transform_0(%arg0: i32, %arg1: i32) -> (i32, i32, i32) {
    %c0_i32 = arith.constant 0 : i32
    %c0_i32_0 = arith.constant 0 : i32
    %c0_i32_1 = arith.constant 0 : i32
    return %arg0, %c0_i32, %c0_i32_0 : i32, i32, i32
  }
  func.func @transform_1(%arg0: i32, %arg1: i32) -> (i32, i32) {
    %c0_i32 = arith.constant 0 : i32
    %c0_i32_0 = arith.constant 0 : i32
    %c0_i32_1 = arith.constant 0 : i32
    return %c0_i32, %c0_i32_0 : i32, i32
  }
  func.func @transform_2(%arg0: i32, %arg1: i32) -> (i32, i32, i32) {
    %c0_i32 = arith.constant 0 : i32
    %c0_i32_0 = arith.constant 0 : i32
    %c0_i32_1 = arith.constant 0 : i32
    %c0_i32_2 = arith.constant 0 : i32
    return %c0_i32, %c0_i32_0, %c0_i32_1 : i32, i32, i32
  }
  func.func @transform_3(%arg0: i32, %arg1: i32) -> (i32, i32, i32) {
    %c0_i32 = arith.constant 0 : i32
    %c0_i32_0 = arith.constant 0 : i32
    %c0_i32_1 = arith.constant 0 : i32
    %c0_i32_2 = arith.constant 0 : i32
    return %c0_i32, %c0_i32_0, %c0_i32_1 : i32, i32, i32
  }
  func.func @transform_4(%arg0: i32, %arg1: i32) -> (i32, i32, i32) {
    %c0_i32 = arith.constant 0 : i32
    %c0_i32_0 = arith.constant 0 : i32
    %c0_i32_1 = arith.constant 0 : i32
    %c0_i32_2 = arith.constant 0 : i32
    return %c0_i32, %c0_i32_0, %c0_i32_1 : i32, i32, i32
  }
  func.func @transform_5(%arg0: i32, %arg1: i32) -> (i32, i32) {
    %c0_i32 = arith.constant 0 : i32
    %c0_i32_0 = arith.constant 0 : i32
    %c0_i32_1 = arith.constant 0 : i32
    return %c0_i32, %c0_i32_0 : i32, i32
  }
  func.func @transform_6(%arg0: i32, %arg1: i32) -> (i32, i32) {
    %c0_i32 = arith.constant 0 : i32
    %c0_i32_0 = arith.constant 0 : i32
    %c0_i32_1 = arith.constant 0 : i32
    return %c0_i32, %c0_i32_0 : i32, i32
  }
  func.func @transform_7(%arg0: i32, %arg1: i32) -> (i32, i32, i32) {
    %c0_i32 = arith.constant 0 : i32
    %c0_i32_0 = arith.constant 0 : i32
    %c0_i32_1 = arith.constant 0 : i32
    %c0_i32_2 = arith.constant 0 : i32
    return %c0_i32, %c0_i32_0, %c0_i32_1 : i32, i32, i32
  }
  func.func @transform_8(%arg0: i32, %arg1: i32) -> (i32, i32) {
    %c0_i32 = arith.constant 0 : i32
    %c0_i32_0 = arith.constant 0 : i32
    %c0_i32_1 = arith.constant 0 : i32
    return %c0_i32, %c0_i32_0 : i32, i32
  }
  func.func @transform_9(%arg0: i32, %arg1: i32) -> (i32, i32, i32) {
    %c0_i32 = arith.constant 0 : i32
    %c0_i32_0 = arith.constant 0 : i32
    return %arg0, %arg1, %c0_i32 : i32, i32, i32
  }
}

</mosaic_0001>

<llo_original>
// kernel: tpu_custom_call.1
$region0: #{tpu_custom_call.1}
  #allocation0 [shape = 'u32[]', space=smem, size = 0x4, offset = 0x4, fixed_abs, tag = 'smem constant byte address 0x4 - core index']
  #allocation1 [shape = 'u32[144,128]{1,0:T(1,128)}', space=vmem, size = 0x12000, scoped, tag = 'internal scratch']
  #allocation2 [shape = 'f32[2,64,128]{2,1,0:T(8,128)}', space=vmem, size = 0x10000, scoped, tag = 'scratch operand']
  #allocation3 [shape = 'bf16[2,64,128]{2,1,0:T(8,128)(2,1)}', space=vmem, size = 0x8000, scoped, tag = 'scratch operand']
  %s0 = inlined_call_operand.hbm [shape: f32[2,64,128], index: 0, kind: input, shape index: {}]
  %s1 = inlined_call_operand.vmem [shape: f32[1,128], index: 1, kind: input, shape index: {}]
  %s2 = inlined_call_operand.hbm [shape: f32[2,128,128], index: 2, kind: input, shape index: {}]
  %s3 = inlined_call_operand.hbm [shape: f32[2,128,128], index: 3, kind: input, shape index: {}]
  %s4 = inlined_call_operand.hbm [shape: bf16[2,128,128], index: 4, kind: input, shape index: {}]
  %s5 = inlined_call_operand.vmem [shape: f32[1,128], index: 5, kind: input, shape index: {}]
  %s6 = inlined_call_operand.vmem [shape: f32[1,128], index: 6, kind: input, shape index: {}]
  %s7 = inlined_call_operand.hbm [shape: bf16[2,128,128], index: 7, kind: input, shape index: {}]
  %s8 = inlined_call_operand.vmem [shape: f32[1,128], index: 8, kind: input, shape index: {}]
  %s9 = inlined_call_operand.hbm [shape: f32[2,64,128], index: 9, kind: output, shape index: {}]
  %s10 = sld [smem:[#allocation0]]
  $region93: #{tpu_custom_call.1} parent=0
    _
  %s12 = ssub.s32 1, %s10
  %s13 = scalar_select 0, %s12, %s10
  $region1: #{tpu_custom_call.1} parent=0
    #allocation4 [shape = 'u8[65536]{0}', space=vmem, size = 0x10000, scoped, tag = 'input window, operand 0']
    #allocation5 [shape = 's32[2]{0}', space=sflag, size = 0x8, scoped, tag = 'scoped memory for tpu_custom_call.1']
    #allocation6 [shape = 's32[2]{0}', space=sflag, size = 0x8, scoped, tag = 'scoped memory for tpu_custom_call.1']
    #allocation7 [shape = 'u8[131072]{0}', space=vmem, size = 0x20000, scoped, tag = 'input window, operand 2, single buffered']
    #allocation8 [shape = 's32[1]{0}', space=sflag, size = 0x4, scoped, tag = 'scoped memory for tpu_custom_call.1']
    #allocation9 [shape = 'u8[131072]{0}', space=vmem, size = 0x20000, scoped, tag = 'input window, operand 3, single buffered']
    #allocation10 [shape = 'u8[65536]{0}', space=vmem, size = 0x10000, scoped, tag = 'input window, operand 4, single buffered']
    #allocation11 [shape = 's32[1]{0}', space=sflag, size = 0x4, scoped, tag = 'scoped memory for tpu_custom_call.1']
    #allocation12 [shape = 'u8[65536]{0}', space=vmem, size = 0x10000, scoped, tag = 'input window, operand 7, single buffered']
    #allocation13 [shape = 'u8[65536]{0}', space=vmem, size = 0x10000, scoped, tag = 'output window, operand 0']
    %14 = vsyncpa [#allocation5], 0
    %s15 = scalar_lea.sflag [#allocation5], 1
    %16 = vsyncpa %s15, 0
    %17 = vsyncpa [#allocation8], 0
    %18 = vsyncpa [#allocation11], 0
    %19 = vsyncpa [#allocation6], 0
    %s20 = scalar_lea.sflag [#allocation6], 1
    %21 = vsyncpa %s20, 0
    loop: start=0, step=1, limit=4
    $region2: #{tpu_custom_call.1} parent=1 // loop_pre_header
      _
    $region3: #{tpu_custom_call.1} parent=1 // loop_header
      %s23 = sphi 0, %s27
      %p24 = scmp.ge.s32.totalorder %s23, 4
      %s30 = sphi 0, %s42
      %s31 = sphi 0, %s38
      %s32 = sphi 0, %s30
      %s33 = sphi 0, %s31
      %s34 = sphi 0, %s32
      %s35 = sphi 0, %s33
      %s45 = sphi 0, %s47
      %s48 = sphi 0, %s45
      %s49 = sphi 0, %s48
      %s65 = sphi 0, %s49
      %s69 = sphi 0, %s69
      %s71 = sphi 0, %s69
      %s72 = sphi 0, %s71
      %s86 = sphi 0, %s72
      %s90 = sphi 0, %s90
      %s92 = sphi 0, %s90
      %s93 = sphi 0, %s92
      %s107 = sphi 0, %s93
      %s111 = sphi 0, %s111
      %s113 = sphi 0, %s111
      %s114 = sphi 0, %s113
      %s128 = sphi 0, %s114
      %s132 = sphi 0, %s132
      %s134 = sphi 0, %s132
      %s135 = sphi 0, %s134
      %s149 = sphi 0, %s135
      %s153 = sphi 0, %s153
      %s155 = sphi 0, %s153
      %s156 = sphi 0, %s155
      %s170 = sphi 0, %s156
      %s174 = sphi 0, %s174
      %s176 = sphi 0, %s174
      %s177 = sphi 0, %s176
      %s191 = sphi 0, %s177
      %s195 = sphi 0, %s195
      %s197 = sphi 0, %s195
      %s198 = sphi 0, %s197
      %s212 = sphi 0, %s198
      %s216 = sphi 0, %s216
      %s218 = sphi 0, %s216
      %s219 = sphi 0, %s218
      %s233 = sphi 0, %s219
      %s241 = sphi 0, %s243
      %s244 = sphi 0, %s241
      %s245 = sphi 0, %s244
      %s261 = sphi 0, %s245
    $region4: #{tpu_custom_call.1} parent=1 // loop_header_branch
      %26 = sbr.rel (%p24) target = $region8
    $region5: #{tpu_custom_call.1} parent=1 // loop_body
      %s28 = ssub.s32 %s23, 1
      %s29 = ssub.s32 %s23, 2
      %s36 = sadd.s32 1, %s31
      %p37 = scmp.ge.s32.totalorder %s36, 1
      %s38 = scalar_select %p37, 0, %s36
      %s39 = sadd.s32 1, %s30
      %s40 = scalar_select %p37, %s39, %s30
      %p41 = scmp.ge.s32.totalorder %s40, 2
      %s42 = scalar_select %p41, 0, %s40
      %s43 = ssub.s32 %s30, %s42
      %p44 = scmp.eq.s32.totalorder %s43, 0
      %s46 = sadd.s32 %s45, 1
      %s47 = scalar_select %p44, %s45, %s46
      %p50 = pneg %p44
      %p51 = scmp.eq.s32.totalorder %s23, 1
      %p52 = por %p50, %p51
      %p53 = scmp.ne.s32.totalorder %s45, %s48
      %p54 = scmp.eq.s32.totalorder %s23, 0
      %p55 = por %p53, %p54
      %p56 = scmp.ne.s32.totalorder %s45, %s48
      %p57 = scmp.eq.s32.totalorder %s28, 1
      %p58 = por %p56, %p57
      %p59 = scmp.ne.s32.totalorder %s48, %s49
      %p60 = scmp.eq.s32.totalorder %s28, 0
      %p61 = por %p59, %p60
      %p62 = scmp.ne.s32.totalorder %s48, %s49
      %p63 = scmp.eq.s32.totalorder %s29, 1
      %p64 = por %p62, %p63
      %p66 = scmp.ne.s32.totalorder %s49, %s65
      %p67 = scmp.eq.s32.totalorder %s29, 0
      %p68 = por %p66, %p67
      %s70 = sadd.s32 %s69, 1
      %p73 = scmp.eq.s32.totalorder %s23, 1
      %p74 = scmp.ne.s32.totalorder %s69, %s71
      %p75 = scmp.eq.s32.totalorder %s23, 0
      %p76 = por %p74, %p75
      %p77 = scmp.ne.s32.totalorder %s69, %s71
      %p78 = scmp.eq.s32.totalorder %s28, 1
      %p79 = por %p77, %p78
      %p80 = scmp.ne.s32.totalorder %s71, %s72
      %p81 = scmp.eq.s32.totalorder %s28, 0
      %p82 = por %p80, %p81
      %p83 = scmp.ne.s32.totalorder %s71, %s72
      %p84 = scmp.eq.s32.totalorder %s29, 1
      %p85 = por %p83, %p84
      %p87 = scmp.ne.s32.totalorder %s72, %s86
      %p88 = scmp.eq.s32.totalorder %s29, 0
      %p89 = por %p87, %p88
      %s91 = sadd.s32 %s90, 1
      %p94 = scmp.eq.s32.totalorder %s23, 1
      %p95 = scmp.ne.s32.totalorder %s90, %s92
      %p96 = scmp.eq.s32.totalorder %s23, 0
      %p97 = por %p95, %p96
      %p98 = scmp.ne.s32.totalorder %s90, %s92
      %p99 = scmp.eq.s32.totalorder %s28, 1
      %p100 = por %p98, %p99
      %p101 = scmp.ne.s32.totalorder %s92, %s93
      %p102 = scmp.eq.s32.totalorder %s28, 0
      %p103 = por %p101, %p102
      %p104 = scmp.ne.s32.totalorder %s92, %s93
      %p105 = scmp.eq.s32.totalorder %s29, 1
      %p106 = por %p104, %p105
      %p108 = scmp.ne.s32.totalorder %s93, %s107
      %p109 = scmp.eq.s32.totalorder %s29, 0
      %p110 = por %p108, %p109
      %s112 = sadd.s32 %s111, 1
      %p115 = scmp.eq.s32.totalorder %s23, 1
      %p116 = scmp.ne.s32.totalorder %s111, %s113
      %p117 = scmp.eq.s32.totalorder %s23, 0
      %p118 = por %p116, %p117
      %p119 = scmp.ne.s32.totalorder %s111, %s113
      %p120 = scmp.eq.s32.totalorder %s28, 1
      %p121 = por %p119, %p120
      %p122 = scmp.ne.s32.totalorder %s113, %s114
      %p123 = scmp.eq.s32.totalorder %s28, 0
      %p124 = por %p122, %p123
      %p125 = scmp.ne.s32.totalorder %s113, %s114
      %p126 = scmp.eq.s32.totalorder %s29, 1
      %p127 = por %p125, %p126
      %p129 = scmp.ne.s32.totalorder %s114, %s128
      %p130 = scmp.eq.s32.totalorder %s29, 0
      %p131 = por %p129, %p130
      %s133 = sadd.s32 %s132, 1
      %p136 = scmp.eq.s32.totalorder %s23, 1
      %p137 = scmp.ne.s32.totalorder %s132, %s134
      %p138 = scmp.eq.s32.totalorder %s23, 0
      %p139 = por %p137, %p138
      %p140 = scmp.ne.s32.totalorder %s132, %s134
      %p141 = scmp.eq.s32.totalorder %s28, 1
      %p142 = por %p140, %p141
      %p143 = scmp.ne.s32.totalorder %s134, %s135
      %p144 = scmp.eq.s32.totalorder %s28, 0
      %p145 = por %p143, %p144
      %p146 = scmp.ne.s32.totalorder %s134, %s135
      %p147 = scmp.eq.s32.totalorder %s29, 1
      %p148 = por %p146, %p147
      %p150 = scmp.ne.s32.totalorder %s135, %s149
      %p151 = scmp.eq.s32.totalorder %s29, 0
      %p152 = por %p150, %p151
      %s154 = sadd.s32 %s153, 1
      %p157 = scmp.eq.s32.totalorder %s23, 1
      %p158 = scmp.ne.s32.totalorder %s153, %s155
      %p159 = scmp.eq.s32.totalorder %s23, 0
      %p160 = por %p158, %p159
      %p161 = scmp.ne.s32.totalorder %s153, %s155
      %p162 = scmp.eq.s32.totalorder %s28, 1
      %p163 = por %p161, %p162
      %p164 = scmp.ne.s32.totalorder %s155, %s156
      %p165 = scmp.eq.s32.totalorder %s28, 0
      %p166 = por %p164, %p165
      %p167 = scmp.ne.s32.totalorder %s155, %s156
      %p168 = scmp.eq.s32.totalorder %s29, 1
      %p169 = por %p167, %p168
      %p171 = scmp.ne.s32.totalorder %s156, %s170
      %p172 = scmp.eq.s32.totalorder %s29, 0
      %p173 = por %p171, %p172
      %s175 = sadd.s32 %s174, 1
      %p178 = scmp.eq.s32.totalorder %s23, 1
      %p179 = scmp.ne.s32.totalorder %s174, %s176
      %p180 = scmp.eq.s32.totalorder %s23, 0
      %p181 = por %p179, %p180
      %p182 = scmp.ne.s32.totalorder %s174, %s176
      %p183 = scmp.eq.s32.totalorder %s28, 1
      %p184 = por %p182, %p183
      %p185 = scmp.ne.s32.totalorder %s176, %s177
      %p186 = scmp.eq.s32.totalorder %s28, 0
      %p187 = por %p185, %p186
      %p188 = scmp.ne.s32.totalorder %s176, %s177
      %p189 = scmp.eq.s32.totalorder %s29, 1
      %p190 = por %p188, %p189
      %p192 = scmp.ne.s32.totalorder %s177, %s191
      %p193 = scmp.eq.s32.totalorder %s29, 0
      %p194 = por %p192, %p193
      %s196 = sadd.s32 %s195, 1
      %p199 = scmp.eq.s32.totalorder %s23, 1
      %p200 = scmp.ne.s32.totalorder %s195, %s197
      %p201 = scmp.eq.s32.totalorder %s23, 0
      %p202 = por %p200, %p201
      %p203 = scmp.ne.s32.totalorder %s195, %s197
      %p204 = scmp.eq.s32.totalorder %s28, 1
      %p205 = por %p203, %p204
      %p206 = scmp.ne.s32.totalorder %s197, %s198
      %p207 = scmp.eq.s32.totalorder %s28, 0
      %p208 = por %p206, %p207
      %p209 = scmp.ne.s32.totalorder %s197, %s198
      %p210 = scmp.eq.s32.totalorder %s29, 1
      %p211 = por %p209, %p210
      %p213 = scmp.ne.s32.totalorder %s198, %s212
      %p214 = scmp.eq.s32.totalorder %s29, 0
      %p215 = por %p213, %p214
      %s217 = sadd.s32 %s216, 1
      %p220 = scmp.eq.s32.totalorder %s23, 1
      %p221 = scmp.ne.s32.totalorder %s216, %s218
      %p222 = scmp.eq.s32.totalorder %s23, 0
      %p223 = por %p221, %p222
      %p224 = scmp.ne.s32.totalorder %s216, %s218
      %p225 = scmp.eq.s32.totalorder %s28, 1
      %p226 = por %p224, %p225
      %p227 = scmp.ne.s32.totalorder %s218, %s219
      %p228 = scmp.eq.s32.totalorder %s28, 0
      %p229 = por %p227, %p228
      %p230 = scmp.ne.s32.totalorder %s218, %s219
      %p231 = scmp.eq.s32.totalorder %s29, 1
      %p232 = por %p230, %p231
      %p234 = scmp.ne.s32.totalorder %s219, %s233
      %p235 = scmp.eq.s32.totalorder %s29, 0
      %p236 = por %p234, %p235
      %s237 = ssub.s32 %s30, %s42
      %s238 = ssub.s32 %s31, %s38
      %s239 = sor.u32 %s237, %s238
      %p240 = scmp.eq.s32.totalorder %s239, 0
      %s242 = sadd.s32 %s241, 1
      %s243 = scalar_select %p240, %s241, %s242
      %p246 = pneg %p240
      %p247 = scmp.eq.s32.totalorder %s23, 1
      %p248 = por %p246, %p247
      %p249 = scmp.ne.s32.totalorder %s241, %s244
      %p250 = scmp.eq.s32.totalorder %s23, 0
      %p251 = por %p249, %p250
      %p252 = scmp.ne.s32.totalorder %s241, %s244
      %p253 = scmp.eq.s32.totalorder %s28, 1
      %p254 = por %p252, %p253
      %p255 = scmp.ne.s32.totalorder %s244, %s245
      %p256 = scmp.eq.s32.totalorder %s28, 0
      %p257 = por %p255, %p256
      %p258 = scmp.ne.s32.totalorder %s244, %s245
      %p259 = scmp.eq.s32.totalorder %s29, 1
      %p260 = por %p258, %p259
      %p262 = scmp.ne.s32.totalorder %s245, %s261
      %p263 = scmp.eq.s32.totalorder %s29, 0
      %p264 = por %p262, %p263
      %p265 = scmp.le.s32.totalorder 1, %s23
      %p266 = scmp.lt.s32.totalorder %s23, 3
      %p267 = pnand %p265, %p266
      %p268 = pneg %p267
      // Predicated region
      $region9: #{tpu_custom_call.1} parent=5 // pred_check
        _
      $region10: #{tpu_custom_call.1} parent=5 // pred_check_branch
        %270 = sbr.rel (%p267) target = $region12
      $region11: #{tpu_custom_call.1} parent=5 // pred_region
        %s271 = ssub.s32 %s23, 1
        // Predicated region
        $region13: #{tpu_custom_call.1} parent=11 // pred_check
          %p272 = pneg %p82
        $region14: #{tpu_custom_call.1} parent=11 // pred_check_branch
          %274 = sbr.rel (%p272) target = $region16
        $region15: #{tpu_custom_call.1} parent=11 // pred_region
          _
        $region16: #{tpu_custom_call.1} parent=11 // pred_fallthru
          _
        // Predicated region
        $region17: #{tpu_custom_call.1} parent=11 // pred_check
          %p275 = pneg %p103
        $region18: #{tpu_custom_call.1} parent=11 // pred_check_branch
          %277 = sbr.rel (%p275) target = $region20
        $region19: #{tpu_custom_call.1} parent=11 // pred_region
          %s279 = ssub.s32 4096, 4096
          %280 = vsyncadd [#allocation8], %s279
          %s281 = sshll.u32 [#allocation7], 4
          %s282 = int_to_ptr.vmem [resolvable:$true] %s281
          %287 = dma.hbm_to_vmem [thread:$0]  %s2, 4096, %s282, [#allocation8], 128, 128, 8
        $region20: #{tpu_custom_call.1} parent=11 // pred_fallthru
          _
        // Predicated region
        $region21: #{tpu_custom_call.1} parent=11 // pred_check
          %p288 = pneg %p124
        $region22: #{tpu_custom_call.1} parent=11 // pred_check_branch
          %290 = sbr.rel (%p288) target = $region24
        $region23: #{tpu_custom_call.1} parent=11 // pred_region
          %s292 = ssub.s32 4096, 4096
          %293 = vsyncadd [#allocation8], %s292
          %s294 = sshll.u32 [#allocation9], 4
          %s295 = int_to_ptr.vmem [resolvable:$true] %s294
          %300 = dma.hbm_to_vmem [thread:$0]  %s3, 4096, %s295, [#allocation8], 128, 128, 8
        $region24: #{tpu_custom_call.1} parent=11 // pred_fallthru
          _
        // Predicated region
        $region25: #{tpu_custom_call.1} parent=11 // pred_check
          %p301 = pneg %p145
        $region26: #{tpu_custom_call.1} parent=11 // pred_check_branch
          %303 = sbr.rel (%p301) target = $region28
        $region27: #{tpu_custom_call.1} parent=11 // pred_region
          %s305 = ssub.s32 2048, 2048
          %306 = vsyncadd [#allocation11], %s305
          %s307 = sshll.u32 [#allocation10], 4
          %s308 = int_to_ptr.vmem [resolvable:$true] %s307
          %313 = dma.hbm_to_vmem [thread:$0]  %s4, 2048, %s308, [#allocation11], 64, 64, 4
        $region28: #{tpu_custom_call.1} parent=11 // pred_fallthru
          _
        // Predicated region
        $region29: #{tpu_custom_call.1} parent=11 // pred_check
          %p314 = pneg %p166
        $region30: #{tpu_custom_call.1} parent=11 // pred_check_branch
          %316 = sbr.rel (%p314) target = $region32
        $region31: #{tpu_custom_call.1} parent=11 // pred_region
          _
        $region32: #{tpu_custom_call.1} parent=11 // pred_fallthru
          _
        // Predicated region
        $region33: #{tpu_custom_call.1} parent=11 // pred_check
          %p317 = pneg %p187
        $region34: #{tpu_custom_call.1} parent=11 // pred_check_branch
          %319 = sbr.rel (%p317) target = $region36
        $region35: #{tpu_custom_call.1} parent=11 // pred_region
          _
        $region36: #{tpu_custom_call.1} parent=11 // pred_fallthru
          _
        // Predicated region
        $region37: #{tpu_custom_call.1} parent=11 // pred_check
          %p320 = pneg %p208
        $region38: #{tpu_custom_call.1} parent=11 // pred_check_branch
          %322 = sbr.rel (%p320) target = $region40
        $region39: #{tpu_custom_call.1} parent=11 // pred_region
          %s324 = ssub.s32 2048, 2048
          %325 = vsyncadd [#allocation11], %s324
          %s326 = sshll.u32 [#allocation12], 4
          %s327 = int_to_ptr.vmem [resolvable:$true] %s326
          %332 = dma.hbm_to_vmem [thread:$0]  %s7, 2048, %s327, [#allocation11], 64, 64, 4
        $region40: #{tpu_custom_call.1} parent=11 // pred_fallthru
          _
        // Predicated region
        $region41: #{tpu_custom_call.1} parent=11 // pred_check
          %p333 = pneg %p229
        $region42: #{tpu_custom_call.1} parent=11 // pred_check_branch
          %335 = sbr.rel (%p333) target = $region44
        $region43: #{tpu_custom_call.1} parent=11 // pred_region
          _
        $region44: #{tpu_custom_call.1} parent=11 // pred_fallthru
          _
      $region12: #{tpu_custom_call.1} parent=5 // pred_fallthru
        _
      %p336 = scmp.lt.s32.totalorder %s23, 2
      // Predicated region
      $region45: #{tpu_custom_call.1} parent=5 // pred_check
        %p337 = pneg %p336
      $region46: #{tpu_custom_call.1} parent=5 // pred_check_branch
        %339 = sbr.rel (%p337) target = $region48
      $region47: #{tpu_custom_call.1} parent=5 // pred_region
        // Predicated region
        $region49: #{tpu_custom_call.1} parent=47 // pred_check
          %p340 = pneg %p55
        $region50: #{tpu_custom_call.1} parent=47 // pred_check_branch
          %342 = sbr.rel (%p340) target = $region52
        $region51: #{tpu_custom_call.1} parent=47 // pred_region
          %s343 = sand.u32 %s45, 1
          %s344 = scalar_lea.sflag [#allocation5], %s343
          %s345 = sand.u32 %s45, 1
          %s346 = smul.addr %s345, 64
          %s347 = scalar_lea.vmem [#allocation4], %s346
          %s349 = ssub.s32 1024, 1024
          %350 = vsyncadd %s344, %s349
          %s351 = smul.addr %s30, 8
          %s352 = smul.addr %s351, 128
          %s353 = scalar_lea.hbm %s0, %s352
          %s354 = sshll.u32 %s347, 4
          %s355 = int_to_ptr.vmem [resolvable:$true] %s354
          %360 = dma.hbm_to_vmem [thread:$0]  %s353, 1024, %s355, %s344, 128, 128, 8
        $region52: #{tpu_custom_call.1} parent=47 // pred_fallthru
          _
      $region48: #{tpu_custom_call.1} parent=5 // pred_fallthru
        _
      %p361 = scmp.le.s32.totalorder 1, %s23
      %p362 = scmp.lt.s32.totalorder %s23, 3
      %p363 = pnand %p361, %p362
      %p364 = pneg %p363
      // Predicated region
      $region53: #{tpu_custom_call.1} parent=5 // pred_check
        _
      $region54: #{tpu_custom_call.1} parent=5 // pred_check_branch
        %366 = sbr.rel (%p363) target = $region56
      $region55: #{tpu_custom_call.1} parent=5 // pred_region
        %s367 = ssub.s32 %s23, 1
        %s368 = sand.u32 %s48, 1
        %s369 = scalar_lea.sflag [#allocation5], %s368
        %s370 = sand.u32 %s48, 1
        %s371 = smul.addr %s370, 64
        %s372 = scalar_lea.vmem [#allocation4], %s371
        // Predicated region
        $region57: #{tpu_custom_call.1} parent=55 // pred_check
          %p373 = pneg %p61
        $region58: #{tpu_custom_call.1} parent=55 // pred_check_branch
          %375 = sbr.rel (%p373) target = $region60
        $region59: #{tpu_custom_call.1} parent=55 // pred_region
          %376 = dma.done %s369, 1024
        $region60: #{tpu_custom_call.1} parent=55 // pred_fallthru
          _
        // Predicated region
        $region61: #{tpu_custom_call.1} parent=55 // pred_check
          %p377 = pneg %p103
        $region62: #{tpu_custom_call.1} parent=55 // pred_check_branch
          %379 = sbr.rel (%p377) target = $region64
        $region63: #{tpu_custom_call.1} parent=55 // pred_region
          %380 = dma.done [#allocation8], 4096
        $region64: #{tpu_custom_call.1} parent=55 // pred_fallthru
          _
        // Predicated region
        $region65: #{tpu_custom_call.1} parent=55 // pred_check
          %p381 = pneg %p124
        $region66: #{tpu_custom_call.1} parent=55 // pred_check_branch
          %383 = sbr.rel (%p381) target = $region68
        $region67: #{tpu_custom_call.1} parent=55 // pred_region
          %384 = dma.done [#allocation8], 4096
        $region68: #{tpu_custom_call.1} parent=55 // pred_fallthru
          _
        // Predicated region
        $region69: #{tpu_custom_call.1} parent=55 // pred_check
          %p385 = pneg %p145
        $region70: #{tpu_custom_call.1} parent=55 // pred_check_branch
          %387 = sbr.rel (%p385) target = $region72
        $region71: #{tpu_custom_call.1} parent=55 // pred_region
          %388 = dma.done [#allocation11], 2048
        $region72: #{tpu_custom_call.1} parent=55 // pred_fallthru
          _
        // Predicated region
        $region73: #{tpu_custom_call.1} parent=55 // pred_check
          %p389 = pneg %p208
        $region74: #{tpu_custom_call.1} parent=55 // pred_check_branch
          %391 = sbr.rel (%p389) target = $region76
        $region75: #{tpu_custom_call.1} parent=55 // pred_region
          %392 = dma.done [#allocation11], 2048
        $region76: #{tpu_custom_call.1} parent=55 // pred_fallthru
          _
        %s393 = sand.u32 %s48, 1
        %s394 = scalar_lea.sflag [#allocation5], %s393
        %s395 = sand.u32 %s48, 1
        %s396 = smul.addr %s395, 64
        %s397 = scalar_lea.vmem [#allocation4], %s396
        %p398 = pneg %p61
        %p399 = pneg %p58
        %p400 = pneg %p82
        %p401 = pneg %p79
        %p402 = pneg %p103
        %p403 = pneg %p100
        %p404 = pneg %p124
        %p405 = pneg %p121
        %p406 = pneg %p145
        %p407 = pneg %p142
        %p408 = pneg %p166
        %p409 = pneg %p163
        %p410 = pneg %p187
        %p411 = pneg %p184
        %p412 = pneg %p208
        %p413 = pneg %p205
        %p414 = pneg %p229
        %p415 = pneg %p226
        %p416 = pneg %p257
        %p417 = pneg %p254
        %s418 = sand.u32 %s244, 1
        %s419 = scalar_lea.sflag [#allocation6], %s418
        %s420 = sand.u32 %s244, 1
        %s421 = smul.addr %s420, 64
        %s422 = scalar_lea.vmem [#allocation13], %s421
        %s423 = smul.u32 8, %s33
        %p425 = scmp.eq.s32.totalorder %s33, 0
        // Predicated region
        $region77: #{tpu_custom_call.1} parent=55 // pred_check
          %p426 = pneg %p425
        $region78: #{tpu_custom_call.1} parent=55 // pred_check_branch
          %428 = sbr.rel (%p426) target = $region80
        $region79: #{tpu_custom_call.1} parent=55 // pred_region
          %v429 = vld [vmem:[%s372] sm:$0xff]
          %v430 = vld [vmem:[%s372 + $0x8] sm:$0xff]
          %v431 = vld [vmem:[%s372 + $0x10] sm:$0xff]
          %v432 = vld [vmem:[%s372 + $0x18] sm:$0xff]
          %v433 = vld [vmem:[%s372 + $0x20] sm:$0xff]
          %v434 = vld [vmem:[%s372 + $0x28] sm:$0xff]
          %v435 = vld [vmem:[%s372 + $0x30] sm:$0xff]
          %v436 = vld [vmem:[%s372 + $0x38] sm:$0xff]
          %v437 = vmul.f32 %v429, %v429
          %v438 = vmul.f32 %v430, %v430
          %v439 = vmul.f32 %v431, %v431
          %v440 = vmul.f32 %v432, %v432
          %v441 = vmul.f32 %v433, %v433
          %v442 = vmul.f32 %v434, %v434
          %v443 = vmul.f32 %v435, %v435
          %v444 = vmul.f32 %v436, %v436
          %445 = vadd.xlane.f32.xlu0 %v437
          %v446 = vpop.xlane.xlu0 %445
          %447 = vadd.xlane.f32.xlu0 %v438
          %v448 = vpop.xlane.xlu0 %447
          %449 = vadd.xlane.f32.xlu0 %v439
          %v450 = vpop.xlane.xlu0 %449
          %451 = vadd.xlane.f32.xlu0 %v440
          %v452 = vpop.xlane.xlu0 %451
          %453 = vadd.xlane.f32.xlu0 %v441
          %v454 = vpop.xlane.xlu0 %453
          %455 = vadd.xlane.f32.xlu0 %v442
          %v456 = vpop.xlane.xlu0 %455
          %457 = vadd.xlane.f32.xlu0 %v443
          %v458 = vpop.xlane.xlu0 %457
          %459 = vadd.xlane.f32.xlu0 %v444
          %v460 = vpop.xlane.xlu0 %459
          %v461 = vrsqrt.pop %v446
          %v462 = vrsqrt.pop %v448
          %v463 = vrsqrt.pop %v450
          %v464 = vrsqrt.pop %v452
          %v465 = vrsqrt.pop %v454
          %v466 = vrsqrt.pop %v456
          %v467 = vrsqrt.pop %v458
          %v468 = vrsqrt.pop %v460
          %v469 = vmin.f32 %v461, 1e+12
          %v470 = vmin.f32 %v462, 1e+12
          %v471 = vmin.f32 %v463, 1e+12
          %v472 = vmin.f32 %v464, 1e+12
          %v473 = vmin.f32 %v465, 1e+12
          %v474 = vmin.f32 %v466, 1e+12
          %v475 = vmin.f32 %v467, 1e+12
          %v476 = vmin.f32 %v468, 1e+12
          %v477 = vmul.f32 %v429, %v469
          %v478 = vmul.f32 %v430, %v470
          %v479 = vmul.f32 %v431, %v471
          %v480 = vmul.f32 %v432, %v472
          %v481 = vmul.f32 %v433, %v473
          %v482 = vmul.f32 %v434, %v474
          %v483 = vmul.f32 %v435, %v475
          %v484 = vmul.f32 %v436, %v476
          %v485 = vld [vmem:[%s1] sm:$0x1]
          %v487 = vlaneseq
          %v488 = vshrl.u32 %v487, 7
          %v489 = vsub.s32 0, %v488
          %v490 = vrot.slane %v485, %v489
          %v492 = vmul.f32 %v477, %v490
          %v493 = vmul.f32 %v478, %v490
          %v494 = vmul.f32 %v479, %v490
          %v495 = vmul.f32 %v480, %v490
          %v496 = vmul.f32 %v481, %v490
          %v497 = vmul.f32 %v482, %v490
          %v498 = vmul.f32 %v483, %v490
          %v499 = vmul.f32 %v484, %v490
          %v500 = vpack.c.bf16 %v493, %v492
          %v501 = vpack.c.bf16 %v495, %v494
          %v502 = vpack.c.bf16 %v497, %v496
          %v503 = vpack.c.bf16 %v499, %v498
          %v504 = vld [vmem:[#allocation9] sm:$0xff]
          %v505 = vld [vmem:[#allocation9 + $0x8] sm:$0xff]
          %v506 = vld [vmem:[#allocation9 + $0x10] sm:$0xff]
          %v507 = vld [vmem:[#allocation9 + $0x18] sm:$0xff]
          %v508 = vld [vmem:[#allocation9 + $0x20] sm:$0xff]
          %v509 = vld [vmem:[#allocation9 + $0x28] sm:$0xff]
          %v510 = vld [vmem:[#allocation9 + $0x30] sm:$0xff]
          %v511 = vld [vmem:[#allocation9 + $0x38] sm:$0xff]
          %v512 = vld [vmem:[#allocation9 + $0x40] sm:$0xff]
          %v513 = vld [vmem:[#allocation9 + $0x48] sm:$0xff]
          %v514 = vld [vmem:[#allocation9 + $0x50] sm:$0xff]
          %v515 = vld [vmem:[#allocation9 + $0x58] sm:$0xff]
          %v516 = vld [vmem:[#allocation9 + $0x60] sm:$0xff]
          %v517 = vld [vmem:[#allocation9 + $0x68] sm:$0xff]
          %v518 = vld [vmem:[#allocation9 + $0x70] sm:$0xff]
          %v519 = vld [vmem:[#allocation9 + $0x78] sm:$0xff]
          %520 = vmatprep.subr.mxu0 0.0
          %521 = vmatpush1.msra.mxu0 %v519
          %522 = vmatprep.subr.mxu0 0.0
          %523 = vmatpush1.msra.mxu0 %v518
          %524 = vmatprep.subr.mxu0 0.0
          %525 = vmatpush1.msra.mxu0 %v517
          %526 = vmatprep.subr.mxu0 0.0
          %527 = vmatpush1.msra.mxu0 %v516
          %528 = vmatprep.subr.mxu0 0.0
          %529 = vmatpush1.msra.mxu0 %v515
          %530 = vmatprep.subr.mxu0 0.0
          %531 = vmatpush1.msra.mxu0 %v514
          %532 = vmatprep.subr.mxu0 0.0
          %533 = vmatpush1.msra.mxu0 %v513
          %534 = vmatprep.subr.mxu0 0.0
          %535 = vmatpush1.msra.mxu0 %v512
          %536 = vmatprep.subr.mxu0 0.0
          %537 = vmatpush1.msra.mxu0 %v511
          %538 = vmatprep.subr.mxu0 0.0
          %539 = vmatpush1.msra.mxu0 %v510
          %540 = vmatprep.subr.mxu0 0.0
          %541 = vmatpush1.msra.mxu0 %v509
          %542 = vmatprep.subr.mxu0 0.0
          %543 = vmatpush1.msra.mxu0 %v508
          %544 = vmatprep.subr.mxu0 0.0
          %545 = vmatpush1.msra.mxu0 %v507
          %546 = vmatprep.subr.mxu0 0.0
          %547 = vmatpush1.msra.mxu0 %v506
          %548 = vmatprep.subr.mxu0 0.0
          %549 = vmatpush1.msra.mxu0 %v505
          %550 = vmatprep.subr.mxu0 0.0
          %551 = vmatpush1.msra.mxu0 %v504
          %552 = vmatprep.subr.mxu0 0.0
          %553 = vmatpush2.msra.mxu0 0.0
          %554 = vmatprep.subr.mxu0 0.0
          %555 = vmatpush2.msra.mxu0 0.0
          %556 = vmatprep.subr.mxu0 0.0
          %557 = vmatpush2.msra.mxu0 0.0
          %558 = vmatprep.subr.mxu0 0.0
          %559 = vmatpush2.msra.mxu0 0.0
          %560 = vmatprep.subr.mxu0 0.0
          %561 = vmatpush2.msra.mxu0 0.0
          %562 = vmatprep.subr.mxu0 0.0
          %563 = vmatpush2.msra.mxu0 0.0
          %564 = vmatprep.subr.mxu0 0.0
          %565 = vmatpush2.msra.mxu0 0.0
          %566 = vmatprep.subr.mxu0 0.0
          %567 = vmatpush2.msra.mxu0 0.0
          %568 = vmatprep.subr.mxu0 0.0
          %569 = vmatpush2.msra.mxu0 0.0
          %570 = vmatprep.subr.mxu0 0.0
          %571 = vmatpush2.msra.mxu0 0.0
          %572 = vmatprep.subr.mxu0 0.0
          %573 = vmatpush2.msra.mxu0 0.0
          %574 = vmatprep.subr.mxu0 0.0
          %575 = vmatpush2.msra.mxu0 0.0
          %576 = vmatprep.subr.mxu0 0.0
          %577 = vmatpush2.msra.mxu0 0.0
          %578 = vmatprep.subr.mxu0 0.0
          %579 = vmatpush2.msra.mxu0 0.0
          %580 = vmatprep.subr.mxu0 0.0
          %581 = vmatpush2.msra.mxu0 0.0
          %582 = vmatprep.subr.mxu0 0.0
          %583 = vmatpush2.msra.mxu0 0.0
          %584 = vmatprep.mubr.f32.mxu0 0.0
          %585 = vmatmul.mubr.f32.gmra.mxu0 %v492
          %v586 = vpop.f32.mrf.mxu0
          %v587 = vadd.f32 0.0, %v586
          %v588 = vpop.f32.mrf.mxu0
          %589 = vmatprep.mubr.f32.mxu0 0.0
          %590 = vmatmul.mubr.f32.gmra.mxu0 %v493
          %v591 = vpop.f32.mrf.mxu0
          %v592 = vadd.f32 0.0, %v591
          %v593 = vpop.f32.mrf.mxu0
          %594 = vmatprep.mubr.f32.mxu0 0.0
          %595 = vmatmul.mubr.f32.gmra.mxu0 %v494
          %v596 = vpop.f32.mrf.mxu0
          %v597 = vadd.f32 0.0, %v596
          %v598 = vpop.f32.mrf.mxu0
          %599 = vmatprep.mubr.f32.mxu0 0.0
          %600 = vmatmul.mubr.f32.gmra.mxu0 %v495
          %v601 = vpop.f32.mrf.mxu0
          %v602 = vadd.f32 0.0, %v601
          %v603 = vpop.f32.mrf.mxu0
          %604 = vmatprep.mubr.f32.mxu0 0.0
          %605 = vmatmul.mubr.f32.gmra.mxu0 %v496
          %v606 = vpop.f32.mrf.mxu0
          %v607 = vadd.f32 0.0, %v606
          %v608 = vpop.f32.mrf.mxu0
          %609 = vmatprep.mubr.f32.mxu0 0.0
          %610 = vmatmul.mubr.f32.gmra.mxu0 %v497
          %v611 = vpop.f32.mrf.mxu0
          %v612 = vadd.f32 0.0, %v611
          %v613 = vpop.f32.mrf.mxu0
          %614 = vmatprep.mubr.f32.mxu0 0.0
          %615 = vmatmul.mubr.f32.gmra.mxu0 %v498
          %v616 = vpop.f32.mrf.mxu0
          %v617 = vadd.f32 0.0, %v616
          %v618 = vpop.f32.mrf.mxu0
          %619 = vmatprep.mubr.f32.mxu0 0.0
          %620 = vmatmul.mubr.f32.gmra.mxu0 %v499
          %v621 = vpop.f32.mrf.mxu0
          %v622 = vadd.f32 0.0, %v621
          %v623 = vpop.f32.mrf.mxu0
          %624 = vdwg.mxu0
          %625 = vst [vmem:[#allocation2] sm:$0xff] %v587
          %626 = vst [vmem:[#allocation2 + $0x8] sm:$0xff] %v592
          %627 = vst [vmem:[#allocation2 + $0x10] sm:$0xff] %v597
          %628 = vst [vmem:[#allocation2 + $0x18] sm:$0xff] %v602
          %629 = vst [vmem:[#allocation2 + $0x20] sm:$0xff] %v607
          %630 = vst [vmem:[#allocation2 + $0x28] sm:$0xff] %v612
          %631 = vst [vmem:[#allocation2 + $0x30] sm:$0xff] %v617
          %632 = vst [vmem:[#allocation2 + $0x38] sm:$0xff] %v622
          %v633 = vld [vmem:[#allocation10] sm:$0xf]
          %v634 = vld [vmem:[#allocation10 + $0x4] sm:$0xf]
          %v635 = vld [vmem:[#allocation10 + $0x8] sm:$0xf]
          %v636 = vld [vmem:[#allocation10 + $0xc] sm:$0xf]
          %v637 = vld [vmem:[#allocation10 + $0x10] sm:$0xf]
          %v638 = vld [vmem:[#allocation10 + $0x14] sm:$0xf]
          %v639 = vld [vmem:[#allocation10 + $0x18] sm:$0xf]
          %v640 = vld [vmem:[#allocation10 + $0x1c] sm:$0xf]
          %v641 = vld [vmem:[#allocation10 + $0x20] sm:$0xf]
          %v642 = vld [vmem:[#allocation10 + $0x24] sm:$0xf]
          %v643 = vld [vmem:[#allocation10 + $0x28] sm:$0xf]
          %v644 = vld [vmem:[#allocation10 + $0x2c] sm:$0xf]
          %v645 = vld [vmem:[#allocation10 + $0x30] sm:$0xf]
          %v646 = vld [vmem:[#allocation10 + $0x34] sm:$0xf]
          %v647 = vld [vmem:[#allocation10 + $0x38] sm:$0xf]
          %v648 = vld [vmem:[#allocation10 + $0x3c] sm:$0xf]
          %v665 = vunpack.c.l.b16 %v633
          %v666 = vunpack.c.l.b16 %v634
          %v667 = vunpack.c.l.b16 %v635
          %v668 = vunpack.c.l.b16 %v636
          %v669 = vunpack.c.l.b16 %v637
          %v670 = vunpack.c.l.b16 %v638
          %v671 = vunpack.c.l.b16 %v639
          %v672 = vunpack.c.l.b16 %v640
          %v673 = vunpack.c.l.b16 %v641
          %v674 = vunpack.c.l.b16 %v642
          %v675 = vunpack.c.l.b16 %v643
          %v676 = vunpack.c.l.b16 %v644
          %v677 = vunpack.c.l.b16 %v645
          %v678 = vunpack.c.l.b16 %v646
          %v679 = vunpack.c.l.b16 %v647
          %v680 = vunpack.c.l.b16 %v648
          %v681 = vpack.c.b16 %v666, %v665
          %v682 = vpack.c.b16 %v668, %v667
          %v683 = vpack.c.b16 %v670, %v669
          %v684 = vpack.c.b16 %v672, %v671
          %v685 = vpack.c.b16 %v674, %v673
          %v686 = vpack.c.b16 %v676, %v675
          %v687 = vpack.c.b16 %v678, %v677
          %v688 = vpack.c.b16 %v680, %v679
          %697 = vmatprep.subr.bf16.mxu0 0
          %698 = vmatpush1.bf16.msra.mxu0 %v688
          %699 = vmatprep.subr.bf16.mxu0 0
          %700 = vmatpush1.bf16.msra.mxu0 %v687
          %701 = vmatprep.subr.bf16.mxu0 0
          %702 = vmatpush1.bf16.msra.mxu0 %v686
          %703 = vmatprep.subr.bf16.mxu0 0
          %704 = vmatpush1.bf16.msra.mxu0 %v685
          %705 = vmatprep.subr.bf16.mxu0 0
          %706 = vmatpush1.bf16.msra.mxu0 %v684
          %707 = vmatprep.subr.bf16.mxu0 0
          %708 = vmatpush1.bf16.msra.mxu0 %v683
          %709 = vmatprep.subr.bf16.mxu0 0
          %710 = vmatpush1.bf16.msra.mxu0 %v682
          %711 = vmatprep.subr.bf16.mxu0 0
          %712 = vmatpush1.bf16.msra.mxu0 %v681
          %713 = vmatprep.subr.bf16.mxu0 0
          %714 = vmatpush2.bf16.msra.mxu0 0
          %715 = vmatprep.subr.bf16.mxu0 0
          %716 = vmatpush2.bf16.msra.mxu0 0
          %717 = vmatprep.subr.bf16.mxu0 0
          %718 = vmatpush2.bf16.msra.mxu0 0
          %719 = vmatprep.subr.bf16.mxu0 0
          %720 = vmatpush2.bf16.msra.mxu0 0
          %721 = vmatprep.subr.bf16.mxu0 0
          %722 = vmatpush2.bf16.msra.mxu0 0
          %723 = vmatprep.subr.bf16.mxu0 0
          %724 = vmatpush2.bf16.msra.mxu0 0
          %725 = vmatprep.subr.bf16.mxu0 0
          %726 = vmatpush2.bf16.msra.mxu0 0
          %727 = vmatprep.subr.bf16.mxu0 0
          %728 = vmatpush2.bf16.msra.mxu0 0
          %729 = vmatprep.mubr.bf16.mxu0 0
          %730 = vmatmul.mubr.bf16.gmra.mxu0 %v500
          %v731 = vpop.f32.mrf.mxu0
          %v732 = vadd.f32 0.0, %v731
          %v733 = vpop.f32.mrf.mxu0
          %v734 = vpop.f32.mrf.mxu0
          %v735 = vadd.f32 0.0, %v734
          %v736 = vpop.f32.mrf.mxu0
          %737 = vmatprep.mubr.bf16.mxu0 0
          %738 = vmatmul.mubr.bf16.gmra.mxu0 %v501
          %v739 = vpop.f32.mrf.mxu0
          %v740 = vadd.f32 0.0, %v739
          %v741 = vpop.f32.mrf.mxu0
          %v742 = vpop.f32.mrf.mxu0
          %v743 = vadd.f32 0.0, %v742
          %v744 = vpop.f32.mrf.mxu0
          %745 = vmatprep.mubr.bf16.mxu0 0
          %746 = vmatmul.mubr.bf16.gmra.mxu0 %v502
          %v747 = vpop.f32.mrf.mxu0
          %v748 = vadd.f32 0.0, %v747
          %v749 = vpop.f32.mrf.mxu0
          %v750 = vpop.f32.mrf.mxu0
          %v751 = vadd.f32 0.0, %v750
          %v752 = vpop.f32.mrf.mxu0
          %753 = vmatprep.mubr.bf16.mxu0 0
          %754 = vmatmul.mubr.bf16.gmra.mxu0 %v503
          %v755 = vpop.f32.mrf.mxu0
          %v756 = vadd.f32 0.0, %v755
          %v757 = vpop.f32.mrf.mxu0
          %v758 = vpop.f32.mrf.mxu0
          %v759 = vadd.f32 0.0, %v758
          %v760 = vpop.f32.mrf.mxu0
          %761 = vdwg.mxu0
          %v762 = vpack.c.bf16 %v735, %v732
          %v763 = vpack.c.bf16 %v743, %v740
          %v764 = vpack.c.bf16 %v751, %v748
          %v765 = vpack.c.bf16 %v759, %v756
          %v770 = vunpack.c.l.b16 %v762
          %v771 = vunpack.c.h.b16 %v762
          %v772 = vunpack.c.l.b16 %v763
          %v773 = vunpack.c.h.b16 %v763
          %v774 = vunpack.c.l.b16 %v764
          %v775 = vunpack.c.h.b16 %v764
          %v776 = vunpack.c.l.b16 %v765
          %v777 = vunpack.c.h.b16 %v765
          %v778 = vpack.c.b16 %v770, %v770
          %v779 = vpack.c.b16 %v771, %v771
          %v780 = vpack.c.b16 %v772, %v772
          %v781 = vpack.c.b16 %v773, %v773
          %v782 = vpack.c.b16 %v774, %v774
          %v783 = vpack.c.b16 %v775, %v775
          %v784 = vpack.c.b16 %v776, %v776
          %v785 = vpack.c.b16 %v777, %v777
          %794 = vst [vmem:[#allocation3] sm:$0xf] %v778
          %795 = vst [vmem:[#allocation3 + $0x4] sm:$0xf] %v779
          %796 = vst [vmem:[#allocation3 + $0x8] sm:$0xf] %v780
          %797 = vst [vmem:[#allocation3 + $0xc] sm:$0xf] %v781
          %798 = vst [vmem:[#allocation3 + $0x10] sm:$0xf] %v782
          %799 = vst [vmem:[#allocation3 + $0x14] sm:$0xf] %v783
          %800 = vst [vmem:[#allocation3 + $0x18] sm:$0xf] %v784
          %801 = vst [vmem:[#allocation3 + $0x1c] sm:$0xf] %v785
          %v802 = vmul.f32 %v587, %v587
          %v803 = vmul.f32 %v592, %v592
          %v804 = vmul.f32 %v597, %v597
          %v805 = vmul.f32 %v602, %v602
          %v806 = vmul.f32 %v607, %v607
          %v807 = vmul.f32 %v612, %v612
          %v808 = vmul.f32 %v617, %v617
          %v809 = vmul.f32 %v622, %v622
          %s810 = scalar_lea.vmem [#allocation9], 128
          %v811 = vld [vmem:[%s810] sm:$0xff]
          %v812 = vld [vmem:[%s810 + $0x8] sm:$0xff]
          %v813 = vld [vmem:[%s810 + $0x10] sm:$0xff]
          %v814 = vld [vmem:[%s810 + $0x18] sm:$0xff]
          %v815 = vld [vmem:[%s810 + $0x20] sm:$0xff]
          %v816 = vld [vmem:[%s810 + $0x28] sm:$0xff]
          %v817 = vld [vmem:[%s810 + $0x30] sm:$0xff]
          %v818 = vld [vmem:[%s810 + $0x38] sm:$0xff]
          %v819 = vld [vmem:[%s810 + $0x40] sm:$0xff]
          %v820 = vld [vmem:[%s810 + $0x48] sm:$0xff]
          %v821 = vld [vmem:[%s810 + $0x50] sm:$0xff]
          %v822 = vld [vmem:[%s810 + $0x58] sm:$0xff]
          %v823 = vld [vmem:[%s810 + $0x60] sm:$0xff]
          %v824 = vld [vmem:[%s810 + $0x68] sm:$0xff]
          %v825 = vld [vmem:[%s810 + $0x70] sm:$0xff]
          %v826 = vld [vmem:[%s810 + $0x78] sm:$0xff]
          %827 = vmatprep.subr.mxu0 0.0
          %828 = vmatpush1.msra.mxu0 %v826
          %829 = vmatprep.subr.mxu0 0.0
          %830 = vmatpush1.msra.mxu0 %v825
          %831 = vmatprep.subr.mxu0 0.0
          %832 = vmatpush1.msra.mxu0 %v824
          %833 = vmatprep.subr.mxu0 0.0
          %834 = vmatpush1.msra.mxu0 %v823
          %835 = vmatprep.subr.mxu0 0.0
          %836 = vmatpush1.msra.mxu0 %v822
          %837 = vmatprep.subr.mxu0 0.0
          %838 = vmatpush1.msra.mxu0 %v821
          %839 = vmatprep.subr.mxu0 0.0
          %840 = vmatpush1.msra.mxu0 %v820
          %841 = vmatprep.subr.mxu0 0.0
          %842 = vmatpush1.msra.mxu0 %v819
          %843 = vmatprep.subr.mxu0 0.0
          %844 = vmatpush1.msra.mxu0 %v818
          %845 = vmatprep.subr.mxu0 0.0
          %846 = vmatpush1.msra.mxu0 %v817
          %847 = vmatprep.subr.mxu0 0.0
          %848 = vmatpush1.msra.mxu0 %v816
          %849 = vmatprep.subr.mxu0 0.0
          %850 = vmatpush1.msra.mxu0 %v815
          %851 = vmatprep.subr.mxu0 0.0
          %852 = vmatpush1.msra.mxu0 %v814
          %853 = vmatprep.subr.mxu0 0.0
          %854 = vmatpush1.msra.mxu0 %v813
          %855 = vmatprep.subr.mxu0 0.0
          %856 = vmatpush1.msra.mxu0 %v812
          %857 = vmatprep.subr.mxu0 0.0
          %858 = vmatpush1.msra.mxu0 %v811
          %859 = vmatprep.subr.mxu0 0.0
          %860 = vmatpush2.msra.mxu0 0.0
          %861 = vmatprep.subr.mxu0 0.0
          %862 = vmatpush2.msra.mxu0 0.0
          %863 = vmatprep.subr.mxu0 0.0
          %864 = vmatpush2.msra.mxu0 0.0
          %865 = vmatprep.subr.mxu0 0.0
          %866 = vmatpush2.msra.mxu0 0.0
          %867 = vmatprep.subr.mxu0 0.0
          %868 = vmatpush2.msra.mxu0 0.0
          %869 = vmatprep.subr.mxu0 0.0
          %870 = vmatpush2.msra.mxu0 0.0
          %871 = vmatprep.subr.mxu0 0.0
          %872 = vmatpush2.msra.mxu0 0.0
          %873 = vmatprep.subr.mxu0 0.0
          %874 = vmatpush2.msra.mxu0 0.0
          %875 = vmatprep.subr.mxu0 0.0
          %876 = vmatpush2.msra.mxu0 0.0
          %877 = vmatprep.subr.mxu0 0.0
          %878 = vmatpush2.msra.mxu0 0.0
          %879 = vmatprep.subr.mxu0 0.0
          %880 = vmatpush2.msra.mxu0 0.0
          %881 = vmatprep.subr.mxu0 0.0
          %882 = vmatpush2.msra.mxu0 0.0
          %883 = vmatprep.subr.mxu0 0.0
          %884 = vmatpush2.msra.mxu0 0.0
          %885 = vmatprep.subr.mxu0 0.0
          %886 = vmatpush2.msra.mxu0 0.0
          %887 = vmatprep.subr.mxu0 0.0
          %888 = vmatpush2.msra.mxu0 0.0
          %889 = vmatprep.subr.mxu0 0.0
          %890 = vmatpush2.msra.mxu0 0.0
          %891 = vmatprep.mubr.f32.mxu0 0.0
          %892 = vmatmul.mubr.f32.gmra.mxu0 %v492
          %v893 = vpop.f32.mrf.mxu0
          %v894 = vadd.f32 0.0, %v893
          %v895 = vpop.f32.mrf.mxu0
          %896 = vmatprep.mubr.f32.mxu0 0.0
          %897 = vmatmul.mubr.f32.gmra.mxu0 %v493
          %v898 = vpop.f32.mrf.mxu0
          %v899 = vadd.f32 0.0, %v898
          %v900 = vpop.f32.mrf.mxu0
          %901 = vmatprep.mubr.f32.mxu0 0.0
          %902 = vmatmul.mubr.f32.gmra.mxu0 %v494
          %v903 = vpop.f32.mrf.mxu0
          %v904 = vadd.f32 0.0, %v903
          %v905 = vpop.f32.mrf.mxu0
          %906 = vmatprep.mubr.f32.mxu0 0.0
          %907 = vmatmul.mubr.f32.gmra.mxu0 %v495
          %v908 = vpop.f32.mrf.mxu0
          %v909 = vadd.f32 0.0, %v908
          %v910 = vpop.f32.mrf.mxu0
          %911 = vmatprep.mubr.f32.mxu0 0.0
          %912 = vmatmul.mubr.f32.gmra.mxu0 %v496
          %v913 = vpop.f32.mrf.mxu0
          %v914 = vadd.f32 0.0, %v913
          %v915 = vpop.f32.mrf.mxu0
          %916 = vmatprep.mubr.f32.mxu0 0.0
          %917 = vmatmul.mubr.f32.gmra.mxu0 %v497
          %v918 = vpop.f32.mrf.mxu0
          %v919 = vadd.f32 0.0, %v918
          %v920 = vpop.f32.mrf.mxu0
          %921 = vmatprep.mubr.f32.mxu0 0.0
          %922 = vmatmul.mubr.f32.gmra.mxu0 %v498
          %v923 = vpop.f32.mrf.mxu0
          %v924 = vadd.f32 0.0, %v923
          %v925 = vpop.f32.mrf.mxu0
          %926 = vmatprep.mubr.f32.mxu0 0.0
          %927 = vmatmul.mubr.f32.gmra.mxu0 %v499
          %v928 = vpop.f32.mrf.mxu0
          %v929 = vadd.f32 0.0, %v928
          %v930 = vpop.f32.mrf.mxu0
          %931 = vdwg.mxu0
          %s932 = scalar_lea.vmem [#allocation2], 64
          %933 = vst [vmem:[%s932] sm:$0xff] %v894
          %934 = vst [vmem:[%s932 + $0x8] sm:$0xff] %v899
          %935 = vst [vmem:[%s932 + $0x10] sm:$0xff] %v904
          %936 = vst [vmem:[%s932 + $0x18] sm:$0xff] %v909
          %937 = vst [vmem:[%s932 + $0x20] sm:$0xff] %v914
          %938 = vst [vmem:[%s932 + $0x28] sm:$0xff] %v919
          %939 = vst [vmem:[%s932 + $0x30] sm:$0xff] %v924
          %940 = vst [vmem:[%s932 + $0x38] sm:$0xff] %v929
          %s941 = scalar_lea.vmem [#allocation10], 64
          %v942 = vld [vmem:[%s941] sm:$0xf]
          %v943 = vld [vmem:[%s941 + $0x4] sm:$0xf]
          %v944 = vld [vmem:[%s941 + $0x8] sm:$0xf]
          %v945 = vld [vmem:[%s941 + $0xc] sm:$0xf]
          %v946 = vld [vmem:[%s941 + $0x10] sm:$0xf]
          %v947 = vld [vmem:[%s941 + $0x14] sm:$0xf]
          %v948 = vld [vmem:[%s941 + $0x18] sm:$0xf]
          %v949 = vld [vmem:[%s941 + $0x1c] sm:$0xf]
          %v950 = vld [vmem:[%s941 + $0x20] sm:$0xf]
          %v951 = vld [vmem:[%s941 + $0x24] sm:$0xf]
          %v952 = vld [vmem:[%s941 + $0x28] sm:$0xf]
          %v953 = vld [vmem:[%s941 + $0x2c] sm:$0xf]
          %v954 = vld [vmem:[%s941 + $0x30] sm:$0xf]
          %v955 = vld [vmem:[%s941 + $0x34] sm:$0xf]
          %v956 = vld [vmem:[%s941 + $0x38] sm:$0xf]
          %v957 = vld [vmem:[%s941 + $0x3c] sm:$0xf]
          %v974 = vunpack.c.l.b16 %v942
          %v975 = vunpack.c.l.b16 %v943
          %v976 = vunpack.c.l.b16 %v944
          %v977 = vunpack.c.l.b16 %v945
          %v978 = vunpack.c.l.b16 %v946
          %v979 = vunpack.c.l.b16 %v947
          %v980 = vunpack.c.l.b16 %v948
          %v981 = vunpack.c.l.b16 %v949
          %v982 = vunpack.c.l.b16 %v950
          %v983 = vunpack.c.l.b16 %v951
          %v984 = vunpack.c.l.b16 %v952
          %v985 = vunpack.c.l.b16 %v953
          %v986 = vunpack.c.l.b16 %v954
          %v987 = vunpack.c.l.b16 %v955
          %v988 = vunpack.c.l.b16 %v956
          %v989 = vunpack.c.l.b16 %v957
          %v990 = vpack.c.b16 %v975, %v974
          %v991 = vpack.c.b16 %v977, %v976
          %v992 = vpack.c.b16 %v979, %v978
          %v993 = vpack.c.b16 %v981, %v980
          %v994 = vpack.c.b16 %v983, %v982
          %v995 = vpack.c.b16 %v985, %v984
          %v996 = vpack.c.b16 %v987, %v986
          %v997 = vpack.c.b16 %v989, %v988
          %1006 = vmatprep.subr.bf16.mxu0 0
          %1007 = vmatpush1.bf16.msra.mxu0 %v997
          %1008 = vmatprep.subr.bf16.mxu0 0
          %1009 = vmatpush1.bf16.msra.mxu0 %v996
          %1010 = vmatprep.subr.bf16.mxu0 0
          %1011 = vmatpush1.bf16.msra.mxu0 %v995
          %1012 = vmatprep.subr.bf16.mxu0 0
          %1013 = vmatpush1.bf16.msra.mxu0 %v994
          %1014 = vmatprep.subr.bf16.mxu0 0
          %1015 = vmatpush1.bf16.msra.mxu0 %v993
          %1016 = vmatprep.subr.bf16.mxu0 0
          %1017 = vmatpush1.bf16.msra.mxu0 %v992
          %1018 = vmatprep.subr.bf16.mxu0 0
          %1019 = vmatpush1.bf16.msra.mxu0 %v991
          %1020 = vmatprep.subr.bf16.mxu0 0
          %1021 = vmatpush1.bf16.msra.mxu0 %v990
          %1022 = vmatprep.subr.bf16.mxu0 0
          %1023 = vmatpush2.bf16.msra.mxu0 0
          %1024 = vmatprep.subr.bf16.mxu0 0
          %1025 = vmatpush2.bf16.msra.mxu0 0
          %1026 = vmatprep.subr.bf16.mxu0 0
          %1027 = vmatpush2.bf16.msra.mxu0 0
          %1028 = vmatprep.subr.bf16.mxu0 0
          %1029 = vmatpush2.bf16.msra.mxu0 0
          %1030 = vmatprep.subr.bf16.mxu0 0
          %1031 = vmatpush2.bf16.msra.mxu0 0
          %1032 = vmatprep.subr.bf16.mxu0 0
          %1033 = vmatpush2.bf16.msra.mxu0 0
          %1034 = vmatprep.subr.bf16.mxu0 0
          %1035 = vmatpush2.bf16.msra.mxu0 0
          %1036 = vmatprep.subr.bf16.mxu0 0
          %1037 = vmatpush2.bf16.msra.mxu0 0
          %1038 = vmatprep.mubr.bf16.mxu0 0
          %1039 = vmatmul.mubr.bf16.gmra.mxu0 %v500
          %v1040 = vpop.f32.mrf.mxu0
          %v1041 = vadd.f32 0.0, %v1040
          %v1042 = vpop.f32.mrf.mxu0
          %v1043 = vpop.f32.mrf.mxu0
          %v1044 = vadd.f32 0.0, %v1043
          %v1045 = vpop.f32.mrf.mxu0
          %1046 = vmatprep.mubr.bf16.mxu0 0
          %1047 = vmatmul.mubr.bf16.gmra.mxu0 %v501
          %v1048 = vpop.f32.mrf.mxu0
          %v1049 = vadd.f32 0.0, %v1048
          %v1050 = vpop.f32.mrf.mxu0
          %v1051 = vpop.f32.mrf.mxu0
          %v1052 = vadd.f32 0.0, %v1051
          %v1053 = vpop.f32.mrf.mxu0
          %1054 = vmatprep.mubr.bf16.mxu0 0
          %1055 = vmatmul.mubr.bf16.gmra.mxu0 %v502
          %v1056 = vpop.f32.mrf.mxu0
          %v1057 = vadd.f32 0.0, %v1056
          %v1058 = vpop.f32.mrf.mxu0
          %v1059 = vpop.f32.mrf.mxu0
          %v1060 = vadd.f32 0.0, %v1059
          %v1061 = vpop.f32.mrf.mxu0
          %1062 = vmatprep.mubr.bf16.mxu0 0
          %1063 = vmatmul.mubr.bf16.gmra.mxu0 %v503
          %v1064 = vpop.f32.mrf.mxu0
          %v1065 = vadd.f32 0.0, %v1064
          %v1066 = vpop.f32.mrf.mxu0
          %v1067 = vpop.f32.mrf.mxu0
          %v1068 = vadd.f32 0.0, %v1067
          %v1069 = vpop.f32.mrf.mxu0
          %1070 = vdwg.mxu0
          %v1071 = vpack.c.bf16 %v1044, %v1041
          %v1072 = vpack.c.bf16 %v1052, %v1049
          %v1073 = vpack.c.bf16 %v1060, %v1057
          %v1074 = vpack.c.bf16 %v1068, %v1065
          %v1079 = vunpack.c.l.b16 %v1071
          %v1080 = vunpack.c.h.b16 %v1071
          %v1081 = vunpack.c.l.b16 %v1072
          %v1082 = vunpack.c.h.b16 %v1072
          %v1083 = vunpack.c.l.b16 %v1073
          %v1084 = vunpack.c.h.b16 %v1073
          %v1085 = vunpack.c.l.b16 %v1074
          %v1086 = vunpack.c.h.b16 %v1074
          %v1087 = vpack.c.b16 %v1079, %v1079
          %v1088 = vpack.c.b16 %v1080, %v1080
          %v1089 = vpack.c.b16 %v1081, %v1081
          %v1090 = vpack.c.b16 %v1082, %v1082
          %v1091 = vpack.c.b16 %v1083, %v1083
          %v1092 = vpack.c.b16 %v1084, %v1084
          %v1093 = vpack.c.b16 %v1085, %v1085
          %v1094 = vpack.c.b16 %v1086, %v1086
          %s1103 = scalar_lea.vmem [#allocation3], 32
          %1104 = vst [vmem:[%s1103] sm:$0xf] %v1087
          %1105 = vst [vmem:[%s1103 + $0x4] sm:$0xf] %v1088
          %1106 = vst [vmem:[%s1103 + $0x8] sm:$0xf] %v1089
          %1107 = vst [vmem:[%s1103 + $0xc] sm:$0xf] %v1090
          %1108 = vst [vmem:[%s1103 + $0x10] sm:$0xf] %v1091
          %1109 = vst [vmem:[%s1103 + $0x14] sm:$0xf] %v1092
          %1110 = vst [vmem:[%s1103 + $0x18] sm:$0xf] %v1093
          %1111 = vst [vmem:[%s1103 + $0x1c] sm:$0xf] %v1094
          %v1112 = vmul.f32 %v894, %v894
          %v1113 = vmul.f32 %v899, %v899
          %v1114 = vmul.f32 %v904, %v904
          %v1115 = vmul.f32 %v909, %v909
          %v1116 = vmul.f32 %v914, %v914
          %v1117 = vmul.f32 %v919, %v919
          %v1118 = vmul.f32 %v924, %v924
          %v1119 = vmul.f32 %v929, %v929
          %v1120 = vadd.f32 %v802, %v1112
          %v1121 = vadd.f32 %v803, %v1113
          %v1122 = vadd.f32 %v804, %v1114
          %v1123 = vadd.f32 %v805, %v1115
          %v1124 = vadd.f32 %v806, %v1116
          %v1125 = vadd.f32 %v807, %v1117
          %v1126 = vadd.f32 %v808, %v1118
          %v1127 = vadd.f32 %v809, %v1119
          %v1128 = vrsqrt.pop %v1120
          %v1129 = vrsqrt.pop %v1121
          %v1130 = vrsqrt.pop %v1122
          %v1131 = vrsqrt.pop %v1123
          %v1132 = vrsqrt.pop %v1124
          %v1133 = vrsqrt.pop %v1125
          %v1134 = vrsqrt.pop %v1126
          %v1135 = vrsqrt.pop %v1127
          %v1136 = vmin.f32 %v1128, 1e+12
          %v1137 = vmin.f32 %v1129, 1e+12
          %v1138 = vmin.f32 %v1130, 1e+12
          %v1139 = vmin.f32 %v1131, 1e+12
          %v1140 = vmin.f32 %v1132, 1e+12
          %v1141 = vmin.f32 %v1133, 1e+12
          %v1142 = vmin.f32 %v1134, 1e+12
          %v1143 = vmin.f32 %v1135, 1e+12
          %v1144 = vld [vmem:[%s6] sm:$0x1]
          %v1146 = vlaneseq
          %v1147 = vshrl.u32 %v1146, 7
          %v1148 = vsub.s32 0, %v1147
          %v1149 = vrot.slane %v1144, %v1148
          %v1151 = vmul.f32 %v1136, %v1149
          %v1152 = vmul.f32 %v1137, %v1149
          %v1153 = vmul.f32 %v1138, %v1149
          %v1154 = vmul.f32 %v1139, %v1149
          %v1155 = vmul.f32 %v1140, %v1149
          %v1156 = vmul.f32 %v1141, %v1149
          %v1157 = vmul.f32 %v1142, %v1149
          %v1158 = vmul.f32 %v1143, %v1149
          %v1159 = vld [vmem:[#allocation2] sm:$0xff]
          %v1160 = vld [vmem:[#allocation2 + $0x8] sm:$0xff]
          %v1161 = vld [vmem:[#allocation2 + $0x10] sm:$0xff]
          %v1162 = vld [vmem:[#allocation2 + $0x18] sm:$0xff]
          %v1163 = vld [vmem:[#allocation2 + $0x20] sm:$0xff]
          %v1164 = vld [vmem:[#allocation2 + $0x28] sm:$0xff]
          %v1165 = vld [vmem:[#allocation2 + $0x30] sm:$0xff]
          %v1166 = vld [vmem:[#allocation2 + $0x38] sm:$0xff]
          %v1167 = vmul.f32 %v1159, %v1151
          %v1168 = vmul.f32 %v1160, %v1152
          %v1169 = vmul.f32 %v1161, %v1153
          %v1170 = vmul.f32 %v1162, %v1154
          %v1171 = vmul.f32 %v1163, %v1155
          %v1172 = vmul.f32 %v1164, %v1156
          %v1173 = vmul.f32 %v1165, %v1157
          %v1174 = vmul.f32 %v1166, %v1158
          %1175 = vst [vmem:[#allocation2] sm:$0xff] %v1167
          %1176 = vst [vmem:[#allocation2 + $0x8] sm:$0xff] %v1168
          %1177 = vst [vmem:[#allocation2 + $0x10] sm:$0xff] %v1169
          %1178 = vst [vmem:[#allocation2 + $0x18] sm:$0xff] %v1170
          %1179 = vst [vmem:[#allocation2 + $0x20] sm:$0xff] %v1171
          %1180 = vst [vmem:[#allocation2 + $0x28] sm:$0xff] %v1172
          %1181 = vst [vmem:[#allocation2 + $0x30] sm:$0xff] %v1173
          %1182 = vst [vmem:[#allocation2 + $0x38] sm:$0xff] %v1174
          %v1183 = vld [vmem:[%s932] sm:$0xff]
          %v1184 = vld [vmem:[%s932 + $0x8] sm:$0xff]
          %v1185 = vld [vmem:[%s932 + $0x10] sm:$0xff]
          %v1186 = vld [vmem:[%s932 + $0x18] sm:$0xff]
          %v1187 = vld [vmem:[%s932 + $0x20] sm:$0xff]
          %v1188 = vld [vmem:[%s932 + $0x28] sm:$0xff]
          %v1189 = vld [vmem:[%s932 + $0x30] sm:$0xff]
          %v1190 = vld [vmem:[%s932 + $0x38] sm:$0xff]
          %v1191 = vmul.f32 %v1183, %v1151
          %v1192 = vmul.f32 %v1184, %v1152
          %v1193 = vmul.f32 %v1185, %v1153
          %v1194 = vmul.f32 %v1186, %v1154
          %v1195 = vmul.f32 %v1187, %v1155
          %v1196 = vmul.f32 %v1188, %v1156
          %v1197 = vmul.f32 %v1189, %v1157
          %v1198 = vmul.f32 %v1190, %v1158
          %1199 = vst [vmem:[%s932] sm:$0xff] %v1191
          %1200 = vst [vmem:[%s932 + $0x8] sm:$0xff] %v1192
          %1201 = vst [vmem:[%s932 + $0x10] sm:$0xff] %v1193
          %1202 = vst [vmem:[%s932 + $0x18] sm:$0xff] %v1194
          %1203 = vst [vmem:[%s932 + $0x20] sm:$0xff] %v1195
          %1204 = vst [vmem:[%s932 + $0x28] sm:$0xff] %v1196
          %1205 = vst [vmem:[%s932 + $0x30] sm:$0xff] %v1197
          %1206 = vst [vmem:[%s932 + $0x38] sm:$0xff] %v1198
        $region80: #{tpu_custom_call.1} parent=55 // pred_fallthru
          _
        %s1207 = smul.u32 %s33, 64
        %s1208 = scalar_lea.vmem %s372, %s1207 [#allocation4]
        %v1209 = vld [vmem:[%s1208] sm:$0xff]
        %v1210 = vld [vmem:[%s1208 + $0x8] sm:$0xff]
        %v1211 = vld [vmem:[%s1208 + $0x10] sm:$0xff]
        %v1212 = vld [vmem:[%s1208 + $0x18] sm:$0xff]
        %v1213 = vld [vmem:[%s1208 + $0x20] sm:$0xff]
        %v1214 = vld [vmem:[%s1208 + $0x28] sm:$0xff]
        %v1215 = vld [vmem:[%s1208 + $0x30] sm:$0xff]
        %v1216 = vld [vmem:[%s1208 + $0x38] sm:$0xff]
        %v1217 = vmul.f32 %v1209, %v1209
        %v1218 = vmul.f32 %v1210, %v1210
        %v1219 = vmul.f32 %v1211, %v1211
        %v1220 = vmul.f32 %v1212, %v1212
        %v1221 = vmul.f32 %v1213, %v1213
        %v1222 = vmul.f32 %v1214, %v1214
        %v1223 = vmul.f32 %v1215, %v1215
        %v1224 = vmul.f32 %v1216, %v1216
        %1225 = vadd.xlane.f32.xlu0 %v1217
        %v1226 = vpop.xlane.xlu0 %1225
        %1227 = vadd.xlane.f32.xlu0 %v1218
        %v1228 = vpop.xlane.xlu0 %1227
        %1229 = vadd.xlane.f32.xlu0 %v1219
        %v1230 = vpop.xlane.xlu0 %1229
        %1231 = vadd.xlane.f32.xlu0 %v1220
        %v1232 = vpop.xlane.xlu0 %1231
        %1233 = vadd.xlane.f32.xlu0 %v1221
        %v1234 = vpop.xlane.xlu0 %1233
        %1235 = vadd.xlane.f32.xlu0 %v1222
        %v1236 = vpop.xlane.xlu0 %1235
        %1237 = vadd.xlane.f32.xlu0 %v1223
        %v1238 = vpop.xlane.xlu0 %1237
        %1239 = vadd.xlane.f32.xlu0 %v1224
        %v1240 = vpop.xlane.xlu0 %1239
        %v1241 = vrsqrt.pop %v1226
        %v1242 = vrsqrt.pop %v1228
        %v1243 = vrsqrt.pop %v1230
        %v1244 = vrsqrt.pop %v1232
        %v1245 = vrsqrt.pop %v1234
        %v1246 = vrsqrt.pop %v1236
        %v1247 = vrsqrt.pop %v1238
        %v1248 = vrsqrt.pop %v1240
        %v1249 = vmin.f32 %v1241, 1e+12
        %v1250 = vmin.f32 %v1242, 1e+12
        %v1251 = vmin.f32 %v1243, 1e+12
        %v1252 = vmin.f32 %v1244, 1e+12
        %v1253 = vmin.f32 %v1245, 1e+12
        %v1254 = vmin.f32 %v1246, 1e+12
        %v1255 = vmin.f32 %v1247, 1e+12
        %v1256 = vmin.f32 %v1248, 1e+12
        %v1257 = vmul.f32 %v1209, %v1249
        %v1258 = vmul.f32 %v1210, %v1250
        %v1259 = vmul.f32 %v1211, %v1251
        %v1260 = vmul.f32 %v1212, %v1252
        %v1261 = vmul.f32 %v1213, %v1253
        %v1262 = vmul.f32 %v1214, %v1254
        %v1263 = vmul.f32 %v1215, %v1255
        %v1264 = vmul.f32 %v1216, %v1256
        %v1265 = vld [vmem:[%s1] sm:$0x1]
        %v1267 = vlaneseq
        %v1268 = vshrl.u32 %v1267, 7
        %v1269 = vsub.s32 0, %v1268
        %v1270 = vrot.slane %v1265, %v1269
        %v1272 = vmul.f32 %v1257, %v1270
        %v1273 = vmul.f32 %v1258, %v1270
        %v1274 = vmul.f32 %v1259, %v1270
        %v1275 = vmul.f32 %v1260, %v1270
        %v1276 = vmul.f32 %v1261, %v1270
        %v1277 = vmul.f32 %v1262, %v1270
        %v1278 = vmul.f32 %v1263, %v1270
        %v1279 = vmul.f32 %v1264, %v1270
        %v1280 = vld [vmem:[#allocation7] sm:$0xff]
        %v1281 = vld [vmem:[#allocation7 + $0x8] sm:$0xff]
        %v1282 = vld [vmem:[#allocation7 + $0x10] sm:$0xff]
        %v1283 = vld [vmem:[#allocation7 + $0x18] sm:$0xff]
        %v1284 = vld [vmem:[#allocation7 + $0x20] sm:$0xff]
        %v1285 = vld [vmem:[#allocation7 + $0x28] sm:$0xff]
        %v1286 = vld [vmem:[#allocation7 + $0x30] sm:$0xff]
        %v1287 = vld [vmem:[#allocation7 + $0x38] sm:$0xff]
        %v1288 = vld [vmem:[#allocation7 + $0x40] sm:$0xff]
        %v1289 = vld [vmem:[#allocation7 + $0x48] sm:$0xff]
        %v1290 = vld [vmem:[#allocation7 + $0x50] sm:$0xff]
        %v1291 = vld [vmem:[#allocation7 + $0x58] sm:$0xff]
        %v1292 = vld [vmem:[#allocation7 + $0x60] sm:$0xff]
        %v1293 = vld [vmem:[#allocation7 + $0x68] sm:$0xff]
        %v1294 = vld [vmem:[#allocation7 + $0x70] sm:$0xff]
        %v1295 = vld [vmem:[#allocation7 + $0x78] sm:$0xff]
        %1296 = vmatprep.subr.mxu0 0.0
        %1297 = vmatpush1.msra.mxu0 %v1295
        %1298 = vmatprep.subr.mxu0 0.0
        %1299 = vmatpush1.msra.mxu0 %v1294
        %1300 = vmatprep.subr.mxu0 0.0
        %1301 = vmatpush1.msra.mxu0 %v1293
        %1302 = vmatprep.subr.mxu0 0.0
        %1303 = vmatpush1.msra.mxu0 %v1292
        %1304 = vmatprep.subr.mxu0 0.0
        %1305 = vmatpush1.msra.mxu0 %v1291
        %1306 = vmatprep.subr.mxu0 0.0
        %1307 = vmatpush1.msra.mxu0 %v1290
        %1308 = vmatprep.subr.mxu0 0.0
        %1309 = vmatpush1.msra.mxu0 %v1289
        %1310 = vmatprep.subr.mxu0 0.0
        %1311 = vmatpush1.msra.mxu0 %v1288
        %1312 = vmatprep.subr.mxu0 0.0
        %1313 = vmatpush1.msra.mxu0 %v1287
        %1314 = vmatprep.subr.mxu0 0.0
        %1315 = vmatpush1.msra.mxu0 %v1286
        %1316 = vmatprep.subr.mxu0 0.0
        %1317 = vmatpush1.msra.mxu0 %v1285
        %1318 = vmatprep.subr.mxu0 0.0
        %1319 = vmatpush1.msra.mxu0 %v1284
        %1320 = vmatprep.subr.mxu0 0.0
        %1321 = vmatpush1.msra.mxu0 %v1283
        %1322 = vmatprep.subr.mxu0 0.0
        %1323 = vmatpush1.msra.mxu0 %v1282
        %1324 = vmatprep.subr.mxu0 0.0
        %1325 = vmatpush1.msra.mxu0 %v1281
        %1326 = vmatprep.subr.mxu0 0.0
        %1327 = vmatpush1.msra.mxu0 %v1280
        %1328 = vmatprep.subr.mxu0 0.0
        %1329 = vmatpush2.msra.mxu0 0.0
        %1330 = vmatprep.subr.mxu0 0.0
        %1331 = vmatpush2.msra.mxu0 0.0
        %1332 = vmatprep.subr.mxu0 0.0
        %1333 = vmatpush2.msra.mxu0 0.0
        %1334 = vmatprep.subr.mxu0 0.0
        %1335 = vmatpush2.msra.mxu0 0.0
        %1336 = vmatprep.subr.mxu0 0.0
        %1337 = vmatpush2.msra.mxu0 0.0
        %1338 = vmatprep.subr.mxu0 0.0
        %1339 = vmatpush2.msra.mxu0 0.0
        %1340 = vmatprep.subr.mxu0 0.0
        %1341 = vmatpush2.msra.mxu0 0.0
        %1342 = vmatprep.subr.mxu0 0.0
        %1343 = vmatpush2.msra.mxu0 0.0
        %1344 = vmatprep.subr.mxu0 0.0
        %1345 = vmatpush2.msra.mxu0 0.0
        %1346 = vmatprep.subr.mxu0 0.0
        %1347 = vmatpush2.msra.mxu0 0.0
        %1348 = vmatprep.subr.mxu0 0.0
        %1349 = vmatpush2.msra.mxu0 0.0
        %1350 = vmatprep.subr.mxu0 0.0
        %1351 = vmatpush2.msra.mxu0 0.0
        %1352 = vmatprep.subr.mxu0 0.0
        %1353 = vmatpush2.msra.mxu0 0.0
        %1354 = vmatprep.subr.mxu0 0.0
        %1355 = vmatpush2.msra.mxu0 0.0
        %1356 = vmatprep.subr.mxu0 0.0
        %1357 = vmatpush2.msra.mxu0 0.0
        %1358 = vmatprep.subr.mxu0 0.0
        %1359 = vmatpush2.msra.mxu0 0.0
        %1360 = vmatprep.mubr.f32.mxu0 0.0
        %1361 = vmatmul.mubr.f32.gmra.mxu0 %v1272
        %v1362 = vpop.f32.mrf.mxu0
        %v1363 = vadd.f32 0.0, %v1362
        %v1364 = vpop.f32.mrf.mxu0
        %1365 = vmatprep.mubr.f32.mxu0 0.0
        %1366 = vmatmul.mubr.f32.gmra.mxu0 %v1273
        %v1367 = vpop.f32.mrf.mxu0
        %v1368 = vadd.f32 0.0, %v1367
        %v1369 = vpop.f32.mrf.mxu0
        %1370 = vmatprep.mubr.f32.mxu0 0.0
        %1371 = vmatmul.mubr.f32.gmra.mxu0 %v1274
        %v1372 = vpop.f32.mrf.mxu0
        %v1373 = vadd.f32 0.0, %v1372
        %v1374 = vpop.f32.mrf.mxu0
        %1375 = vmatprep.mubr.f32.mxu0 0.0
        %1376 = vmatmul.mubr.f32.gmra.mxu0 %v1275
        %v1377 = vpop.f32.mrf.mxu0
        %v1378 = vadd.f32 0.0, %v1377
        %v1379 = vpop.f32.mrf.mxu0
        %1380 = vmatprep.mubr.f32.mxu0 0.0
        %1381 = vmatmul.mubr.f32.gmra.mxu0 %v1276
        %v1382 = vpop.f32.mrf.mxu0
        %v1383 = vadd.f32 0.0, %v1382
        %v1384 = vpop.f32.mrf.mxu0
        %1385 = vmatprep.mubr.f32.mxu0 0.0
        %1386 = vmatmul.mubr.f32.gmra.mxu0 %v1277
        %v1387 = vpop.f32.mrf.mxu0
        %v1388 = vadd.f32 0.0, %v1387
        %v1389 = vpop.f32.mrf.mxu0
        %1390 = vmatprep.mubr.f32.mxu0 0.0
        %1391 = vmatmul.mubr.f32.gmra.mxu0 %v1278
        %v1392 = vpop.f32.mrf.mxu0
        %v1393 = vadd.f32 0.0, %v1392
        %v1394 = vpop.f32.mrf.mxu0
        %1395 = vmatprep.mubr.f32.mxu0 0.0
        %1396 = vmatmul.mubr.f32.gmra.mxu0 %v1279
        %v1397 = vpop.f32.mrf.mxu0
        %v1398 = vadd.f32 0.0, %v1397
        %v1399 = vpop.f32.mrf.mxu0
        %1400 = vdwg.mxu0
        %s1401 = scalar_lea.vmem [#allocation7], 128
        %v1402 = vld [vmem:[%s1401] sm:$0xff]
        %v1403 = vld [vmem:[%s1401 + $0x8] sm:$0xff]
        %v1404 = vld [vmem:[%s1401 + $0x10] sm:$0xff]
        %v1405 = vld [vmem:[%s1401 + $0x18] sm:$0xff]
        %v1406 = vld [vmem:[%s1401 + $0x20] sm:$0xff]
        %v1407 = vld [vmem:[%s1401 + $0x28] sm:$0xff]
        %v1408 = vld [vmem:[%s1401 + $0x30] sm:$0xff]
        %v1409 = vld [vmem:[%s1401 + $0x38] sm:$0xff]
        %v1410 = vld [vmem:[%s1401 + $0x40] sm:$0xff]
        %v1411 = vld [vmem:[%s1401 + $0x48] sm:$0xff]
        %v1412 = vld [vmem:[%s1401 + $0x50] sm:$0xff]
        %v1413 = vld [vmem:[%s1401 + $0x58] sm:$0xff]
        %v1414 = vld [vmem:[%s1401 + $0x60] sm:$0xff]
        %v1415 = vld [vmem:[%s1401 + $0x68] sm:$0xff]
        %v1416 = vld [vmem:[%s1401 + $0x70] sm:$0xff]
        %v1417 = vld [vmem:[%s1401 + $0x78] sm:$0xff]
        %1418 = vmatprep.subr.mxu0 0.0
        %1419 = vmatpush1.msra.mxu0 %v1417
        %1420 = vmatprep.subr.mxu0 0.0
        %1421 = vmatpush1.msra.mxu0 %v1416
        %1422 = vmatprep.subr.mxu0 0.0
        %1423 = vmatpush1.msra.mxu0 %v1415
        %1424 = vmatprep.subr.mxu0 0.0
        %1425 = vmatpush1.msra.mxu0 %v1414
        %1426 = vmatprep.subr.mxu0 0.0
        %1427 = vmatpush1.msra.mxu0 %v1413
        %1428 = vmatprep.subr.mxu0 0.0
        %1429 = vmatpush1.msra.mxu0 %v1412
        %1430 = vmatprep.subr.mxu0 0.0
        %1431 = vmatpush1.msra.mxu0 %v1411
        %1432 = vmatprep.subr.mxu0 0.0
        %1433 = vmatpush1.msra.mxu0 %v1410
        %1434 = vmatprep.subr.mxu0 0.0
        %1435 = vmatpush1.msra.mxu0 %v1409
        %1436 = vmatprep.subr.mxu0 0.0
        %1437 = vmatpush1.msra.mxu0 %v1408
        %1438 = vmatprep.subr.mxu0 0.0
        %1439 = vmatpush1.msra.mxu0 %v1407
        %1440 = vmatprep.subr.mxu0 0.0
        %1441 = vmatpush1.msra.mxu0 %v1406
        %1442 = vmatprep.subr.mxu0 0.0
        %1443 = vmatpush1.msra.mxu0 %v1405
        %1444 = vmatprep.subr.mxu0 0.0
        %1445 = vmatpush1.msra.mxu0 %v1404
        %1446 = vmatprep.subr.mxu0 0.0
        %1447 = vmatpush1.msra.mxu0 %v1403
        %1448 = vmatprep.subr.mxu0 0.0
        %1449 = vmatpush1.msra.mxu0 %v1402
        %1450 = vmatprep.subr.mxu0 0.0
        %1451 = vmatpush2.msra.mxu0 0.0
        %1452 = vmatprep.subr.mxu0 0.0
        %1453 = vmatpush2.msra.mxu0 0.0
        %1454 = vmatprep.subr.mxu0 0.0
        %1455 = vmatpush2.msra.mxu0 0.0
        %1456 = vmatprep.subr.mxu0 0.0
        %1457 = vmatpush2.msra.mxu0 0.0
        %1458 = vmatprep.subr.mxu0 0.0
        %1459 = vmatpush2.msra.mxu0 0.0
        %1460 = vmatprep.subr.mxu0 0.0
        %1461 = vmatpush2.msra.mxu0 0.0
        %1462 = vmatprep.subr.mxu0 0.0
        %1463 = vmatpush2.msra.mxu0 0.0
        %1464 = vmatprep.subr.mxu0 0.0
        %1465 = vmatpush2.msra.mxu0 0.0
        %1466 = vmatprep.subr.mxu0 0.0
        %1467 = vmatpush2.msra.mxu0 0.0
        %1468 = vmatprep.subr.mxu0 0.0
        %1469 = vmatpush2.msra.mxu0 0.0
        %1470 = vmatprep.subr.mxu0 0.0
        %1471 = vmatpush2.msra.mxu0 0.0
        %1472 = vmatprep.subr.mxu0 0.0
        %1473 = vmatpush2.msra.mxu0 0.0
        %1474 = vmatprep.subr.mxu0 0.0
        %1475 = vmatpush2.msra.mxu0 0.0
        %1476 = vmatprep.subr.mxu0 0.0
        %1477 = vmatpush2.msra.mxu0 0.0
        %1478 = vmatprep.subr.mxu0 0.0
        %1479 = vmatpush2.msra.mxu0 0.0
        %1480 = vmatprep.subr.mxu0 0.0
        %1481 = vmatpush2.msra.mxu0 0.0
        %1482 = vmatprep.mubr.f32.mxu0 0.0
        %1483 = vmatmul.mubr.f32.gmra.mxu0 %v1272
        %v1484 = vpop.f32.mrf.mxu0
        %v1485 = vadd.f32 0.0, %v1484
        %v1486 = vpop.f32.mrf.mxu0
        %1487 = vmatprep.mubr.f32.mxu0 0.0
        %1488 = vmatmul.mubr.f32.gmra.mxu0 %v1273
        %v1489 = vpop.f32.mrf.mxu0
        %v1490 = vadd.f32 0.0, %v1489
        %v1491 = vpop.f32.mrf.mxu0
        %1492 = vmatprep.mubr.f32.mxu0 0.0
        %1493 = vmatmul.mubr.f32.gmra.mxu0 %v1274
        %v1494 = vpop.f32.mrf.mxu0
        %v1495 = vadd.f32 0.0, %v1494
        %v1496 = vpop.f32.mrf.mxu0
        %1497 = vmatprep.mubr.f32.mxu0 0.0
        %1498 = vmatmul.mubr.f32.gmra.mxu0 %v1275
        %v1499 = vpop.f32.mrf.mxu0
        %v1500 = vadd.f32 0.0, %v1499
        %v1501 = vpop.f32.mrf.mxu0
        %1502 = vmatprep.mubr.f32.mxu0 0.0
        %1503 = vmatmul.mubr.f32.gmra.mxu0 %v1276
        %v1504 = vpop.f32.mrf.mxu0
        %v1505 = vadd.f32 0.0, %v1504
        %v1506 = vpop.f32.mrf.mxu0
        %1507 = vmatprep.mubr.f32.mxu0 0.0
        %1508 = vmatmul.mubr.f32.gmra.mxu0 %v1277
        %v1509 = vpop.f32.mrf.mxu0
        %v1510 = vadd.f32 0.0, %v1509
        %v1511 = vpop.f32.mrf.mxu0
        %1512 = vmatprep.mubr.f32.mxu0 0.0
        %1513 = vmatmul.mubr.f32.gmra.mxu0 %v1278
        %v1514 = vpop.f32.mrf.mxu0
        %v1515 = vadd.f32 0.0, %v1514
        %v1516 = vpop.f32.mrf.mxu0
        %1517 = vmatprep.mubr.f32.mxu0 0.0
        %1518 = vmatmul.mubr.f32.gmra.mxu0 %v1279
        %v1519 = vpop.f32.mrf.mxu0
        %v1520 = vadd.f32 0.0, %v1519
        %v1521 = vpop.f32.mrf.mxu0
        %1522 = vdwg.mxu0
        %v1523 = vmul.f32 %v1363, %v1363
        %v1524 = vmul.f32 %v1368, %v1368
        %v1525 = vmul.f32 %v1373, %v1373
        %v1526 = vmul.f32 %v1378, %v1378
        %v1527 = vmul.f32 %v1383, %v1383
        %v1528 = vmul.f32 %v1388, %v1388
        %v1529 = vmul.f32 %v1393, %v1393
        %v1530 = vmul.f32 %v1398, %v1398
        %v1531 = vmul.f32 %v1485, %v1485
        %v1532 = vmul.f32 %v1490, %v1490
        %v1533 = vmul.f32 %v1495, %v1495
        %v1534 = vmul.f32 %v1500, %v1500
        %v1535 = vmul.f32 %v1505, %v1505
        %v1536 = vmul.f32 %v1510, %v1510
        %v1537 = vmul.f32 %v1515, %v1515
        %v1538 = vmul.f32 %v1520, %v1520
        %v1539 = vadd.f32 %v1523, %v1531
        %v1540 = vadd.f32 %v1524, %v1532
        %v1541 = vadd.f32 %v1525, %v1533
        %v1542 = vadd.f32 %v1526, %v1534
        %v1543 = vadd.f32 %v1527, %v1535
        %v1544 = vadd.f32 %v1528, %v1536
        %v1545 = vadd.f32 %v1529, %v1537
        %v1546 = vadd.f32 %v1530, %v1538
        %v1547 = vrsqrt.pop %v1539
        %v1548 = vrsqrt.pop %v1540
        %v1549 = vrsqrt.pop %v1541
        %v1550 = vrsqrt.pop %v1542
        %v1551 = vrsqrt.pop %v1543
        %v1552 = vrsqrt.pop %v1544
        %v1553 = vrsqrt.pop %v1545
        %v1554 = vrsqrt.pop %v1546
        %v1555 = vmin.f32 %v1547, 1e+12
        %v1556 = vmin.f32 %v1548, 1e+12
        %v1557 = vmin.f32 %v1549, 1e+12
        %v1558 = vmin.f32 %v1550, 1e+12
        %v1559 = vmin.f32 %v1551, 1e+12
        %v1560 = vmin.f32 %v1552, 1e+12
        %v1561 = vmin.f32 %v1553, 1e+12
        %v1562 = vmin.f32 %v1554, 1e+12
        %v1563 = vld [vmem:[%s5] sm:$0x1]
        %v1565 = vlaneseq
        %v1566 = vshrl.u32 %v1565, 7
        %v1567 = vsub.s32 0, %v1566
        %v1568 = vrot.slane %v1563, %v1567
        %v1570 = vmul.f32 %v1555, %v1568
        %v1571 = vmul.f32 %v1556, %v1568
        %v1572 = vmul.f32 %v1557, %v1568
        %v1573 = vmul.f32 %v1558, %v1568
        %v1574 = vmul.f32 %v1559, %v1568
        %v1575 = vmul.f32 %v1560, %v1568
        %v1576 = vmul.f32 %v1561, %v1568
        %v1577 = vmul.f32 %v1562, %v1568
        %v1578 = vmul.f32 %v1363, %v1570
        %v1579 = vmul.f32 %v1368, %v1571
        %v1580 = vmul.f32 %v1373, %v1572
        %v1581 = vmul.f32 %v1378, %v1573
        %v1582 = vmul.f32 %v1383, %v1574
        %v1583 = vmul.f32 %v1388, %v1575
        %v1584 = vmul.f32 %v1393, %v1576
        %v1585 = vmul.f32 %v1398, %v1577
        %v1586 = vld [vmem:[#allocation2] sm:$0xff]
        %v1587 = vld [vmem:[#allocation2 + $0x8] sm:$0xff]
        %v1588 = vld [vmem:[#allocation2 + $0x10] sm:$0xff]
        %v1589 = vld [vmem:[#allocation2 + $0x18] sm:$0xff]
        %v1590 = vld [vmem:[#allocation2 + $0x20] sm:$0xff]
        %v1591 = vld [vmem:[#allocation2 + $0x28] sm:$0xff]
        %v1592 = vld [vmem:[#allocation2 + $0x30] sm:$0xff]
        %v1593 = vld [vmem:[#allocation2 + $0x38] sm:$0xff]
        %1594 = vmatprep.subr.mxu0 0.0
        %1595 = vmatpush1.xpose.msra.mxu0 0.0
        %1596 = vmatprep.subr.mxu0 0.0
        %1597 = vmatpush1.xpose.msra.mxu0 0.0
        %1598 = vmatprep.subr.mxu0 0.0
        %1599 = vmatpush1.xpose.msra.mxu0 0.0
        %1600 = vmatprep.subr.mxu0 0.0
        %1601 = vmatpush1.xpose.msra.mxu0 0.0
        %1602 = vmatprep.subr.mxu0 0.0
        %1603 = vmatpush1.xpose.msra.mxu0 0.0
        %1604 = vmatprep.subr.mxu0 0.0
        %1605 = vmatpush1.xpose.msra.mxu0 0.0
        %1606 = vmatprep.subr.mxu0 0.0
        %1607 = vmatpush1.xpose.msra.mxu0 0.0
        %1608 = vmatprep.subr.mxu0 0.0
        %1609 = vmatpush1.xpose.msra.mxu0 0.0
        %1610 = vmatprep.subr.mxu0 0.0
        %1611 = vmatpush1.xpose.msra.mxu0 %v1593
        %1612 = vmatprep.subr.mxu0 0.0
        %1613 = vmatpush1.xpose.msra.mxu0 %v1592
        %1614 = vmatprep.subr.mxu0 0.0
        %1615 = vmatpush1.xpose.msra.mxu0 %v1591
        %1616 = vmatprep.subr.mxu0 0.0
        %1617 = vmatpush1.xpose.msra.mxu0 %v1590
        %1618 = vmatprep.subr.mxu0 0.0
        %1619 = vmatpush1.xpose.msra.mxu0 %v1589
        %1620 = vmatprep.subr.mxu0 0.0
        %1621 = vmatpush1.xpose.msra.mxu0 %v1588
        %1622 = vmatprep.subr.mxu0 0.0
        %1623 = vmatpush1.xpose.msra.mxu0 %v1587
        %1624 = vmatprep.subr.mxu0 0.0
        %1625 = vmatpush1.xpose.msra.mxu0 %v1586
        %1626 = vmatprep.subr.mxu0 0.0
        %1627 = vmatpush2.xpose.msra.mxu0 0.0
        %1628 = vmatprep.subr.mxu0 0.0
        %1629 = vmatpush2.xpose.msra.mxu0 0.0
        %1630 = vmatprep.subr.mxu0 0.0
        %1631 = vmatpush2.xpose.msra.mxu0 0.0
        %1632 = vmatprep.subr.mxu0 0.0
        %1633 = vmatpush2.xpose.msra.mxu0 0.0
        %1634 = vmatprep.subr.mxu0 0.0
        %1635 = vmatpush2.xpose.msra.mxu0 0.0
        %1636 = vmatprep.subr.mxu0 0.0
        %1637 = vmatpush2.xpose.msra.mxu0 0.0
        %1638 = vmatprep.subr.mxu0 0.0
        %1639 = vmatpush2.xpose.msra.mxu0 0.0
        %1640 = vmatprep.subr.mxu0 0.0
        %1641 = vmatpush2.xpose.msra.mxu0 0.0
        %1642 = vmatprep.subr.mxu0 0.0
        %1643 = vmatpush2.xpose.msra.mxu0 0.0
        %1644 = vmatprep.subr.mxu0 0.0
        %1645 = vmatpush2.xpose.msra.mxu0 0.0
        %1646 = vmatprep.subr.mxu0 0.0
        %1647 = vmatpush2.xpose.msra.mxu0 0.0
        %1648 = vmatprep.subr.mxu0 0.0
        %1649 = vmatpush2.xpose.msra.mxu0 0.0
        %1650 = vmatprep.subr.mxu0 0.0
        %1651 = vmatpush2.xpose.msra.mxu0 0.0
        %1652 = vmatprep.subr.mxu0 0.0
        %1653 = vmatpush2.xpose.msra.mxu0 0.0
        %1654 = vmatprep.subr.mxu0 0.0
        %1655 = vmatpush2.xpose.msra.mxu0 0.0
        %1656 = vmatprep.subr.mxu0 0.0
        %1657 = vmatpush2.xpose.msra.mxu0 0.0
        %1658 = vmatprep.mubr.f32.mxu0 0.0
        %1659 = vmatmul.mubr.f32.gmra.mxu0 %v1578
        %v1660 = vpop.f32.mrf.mxu0
        %v1661 = vadd.f32 0.0, %v1660
        %v1662 = vpop.f32.mrf.mxu0
        %1663 = vmatprep.mubr.f32.mxu0 0.0
        %1664 = vmatmul.mubr.f32.gmra.mxu0 %v1579
        %v1665 = vpop.f32.mrf.mxu0
        %v1666 = vadd.f32 0.0, %v1665
        %v1667 = vpop.f32.mrf.mxu0
        %1668 = vmatprep.mubr.f32.mxu0 0.0
        %1669 = vmatmul.mubr.f32.gmra.mxu0 %v1580
        %v1670 = vpop.f32.mrf.mxu0
        %v1671 = vadd.f32 0.0, %v1670
        %v1672 = vpop.f32.mrf.mxu0
        %1673 = vmatprep.mubr.f32.mxu0 0.0
        %1674 = vmatmul.mubr.f32.gmra.mxu0 %v1581
        %v1675 = vpop.f32.mrf.mxu0
        %v1676 = vadd.f32 0.0, %v1675
        %v1677 = vpop.f32.mrf.mxu0
        %1678 = vmatprep.mubr.f32.mxu0 0.0
        %1679 = vmatmul.mubr.f32.gmra.mxu0 %v1582
        %v1680 = vpop.f32.mrf.mxu0
        %v1681 = vadd.f32 0.0, %v1680
        %v1682 = vpop.f32.mrf.mxu0
        %1683 = vmatprep.mubr.f32.mxu0 0.0
        %1684 = vmatmul.mubr.f32.gmra.mxu0 %v1583
        %v1685 = vpop.f32.mrf.mxu0
        %v1686 = vadd.f32 0.0, %v1685
        %v1687 = vpop.f32.mrf.mxu0
        %1688 = vmatprep.mubr.f32.mxu0 0.0
        %1689 = vmatmul.mubr.f32.gmra.mxu0 %v1584
        %v1690 = vpop.f32.mrf.mxu0
        %v1691 = vadd.f32 0.0, %v1690
        %v1692 = vpop.f32.mrf.mxu0
        %1693 = vmatprep.mubr.f32.mxu0 0.0
        %1694 = vmatmul.mubr.f32.gmra.mxu0 %v1585
        %v1695 = vpop.f32.mrf.mxu0
        %v1696 = vadd.f32 0.0, %v1695
        %v1697 = vpop.f32.mrf.mxu0
        %1698 = vdwg.mxu0
        %vm1699 = vcmask 523264
        %v1700 = vsel %vm1699, %v1661, -inf
        %1701 = vmax.xlane.f32.xlu0 %v1700
        %v1702 = vpop.xlane.xlu0 %1701
        %v1703 = vsel %vm1699, %v1666, -inf
        %1704 = vmax.xlane.f32.xlu0 %v1703
        %v1705 = vpop.xlane.xlu0 %1704
        %v1706 = vsel %vm1699, %v1671, -inf
        %1707 = vmax.xlane.f32.xlu0 %v1706
        %v1708 = vpop.xlane.xlu0 %1707
        %v1709 = vsel %vm1699, %v1676, -inf
        %1710 = vmax.xlane.f32.xlu0 %v1709
        %v1711 = vpop.xlane.xlu0 %1710
        %v1712 = vsel %vm1699, %v1681, -inf
        %1713 = vmax.xlane.f32.xlu0 %v1712
        %v1714 = vpop.xlane.xlu0 %1713
        %v1715 = vsel %vm1699, %v1686, -inf
        %1716 = vmax.xlane.f32.xlu0 %v1715
        %v1717 = vpop.xlane.xlu0 %1716
        %v1718 = vsel %vm1699, %v1691, -inf
        %1719 = vmax.xlane.f32.xlu0 %v1718
        %v1720 = vpop.xlane.xlu0 %1719
        %v1721 = vsel %vm1699, %v1696, -inf
        %1722 = vmax.xlane.f32.xlu0 %v1721
        %v1723 = vpop.xlane.xlu0 %1722
        %v1724 = vsub.f32 %v1661, %v1702
        %v1725 = vsub.f32 %v1666, %v1705
        %v1726 = vsub.f32 %v1671, %v1708
        %v1727 = vsub.f32 %v1676, %v1711
        %v1728 = vsub.f32 %v1681, %v1714
        %v1729 = vsub.f32 %v1686, %v1717
        %v1730 = vsub.f32 %v1691, %v1720
        %v1731 = vsub.f32 %v1696, %v1723
        %v1732 = vmul.f32 %v1724, 1.442695
        %v1733 = vpow.pop %v1732
        %v1734 = vmul.f32 %v1725, 1.442695
        %v1735 = vpow.pop %v1734
        %v1736 = vmul.f32 %v1726, 1.442695
        %v1737 = vpow.pop %v1736
        %v1738 = vmul.f32 %v1727, 1.442695
        %v1739 = vpow.pop %v1738
        %v1740 = vmul.f32 %v1728, 1.442695
        %v1741 = vpow.pop %v1740
        %v1742 = vmul.f32 %v1729, 1.442695
        %v1743 = vpow.pop %v1742
        %v1744 = vmul.f32 %v1730, 1.442695
        %v1745 = vpow.pop %v1744
        %v1746 = vmul.f32 %v1731, 1.442695
        %v1747 = vpow.pop %v1746
        %v1748 = vsel %vm1699, %v1733, 0.0
        %1749 = vadd.xlane.f32.xlu0 %v1748
        %v1750 = vpop.xlane.xlu0 %1749
        %v1751 = vsel %vm1699, %v1735, 0.0
        %1752 = vadd.xlane.f32.xlu0 %v1751
        %v1753 = vpop.xlane.xlu0 %1752
        %v1754 = vsel %vm1699, %v1737, 0.0
        %1755 = vadd.xlane.f32.xlu0 %v1754
        %v1756 = vpop.xlane.xlu0 %1755
        %v1757 = vsel %vm1699, %v1739, 0.0
        %1758 = vadd.xlane.f32.xlu0 %v1757
        %v1759 = vpop.xlane.xlu0 %1758
        %v1760 = vsel %vm1699, %v1741, 0.0
        %1761 = vadd.xlane.f32.xlu0 %v1760
        %v1762 = vpop.xlane.xlu0 %1761
        %v1763 = vsel %vm1699, %v1743, 0.0
        %1764 = vadd.xlane.f32.xlu0 %v1763
        %v1765 = vpop.xlane.xlu0 %1764
        %v1766 = vsel %vm1699, %v1745, 0.0
        %1767 = vadd.xlane.f32.xlu0 %v1766
        %v1768 = vpop.xlane.xlu0 %1767
        %v1769 = vsel %vm1699, %v1747, 0.0
        %1770 = vadd.xlane.f32.xlu0 %v1769
        %v1771 = vpop.xlane.xlu0 %1770
        %v1772 = vpack.c.bf16 %v1735, %v1733
        %v1773 = vpack.c.bf16 %v1739, %v1737
        %v1774 = vpack.c.bf16 %v1743, %v1741
        %v1775 = vpack.c.bf16 %v1747, %v1745
        %v1776 = vld [vmem:[#allocation3] sm:$0xf]
        %v1777 = vld [vmem:[#allocation3 + $0x4] sm:$0xf]
        %v1778 = vld [vmem:[#allocation3 + $0x8] sm:$0xf]
        %v1779 = vld [vmem:[#allocation3 + $0xc] sm:$0xf]
        %v1780 = vld [vmem:[#allocation3 + $0x10] sm:$0xf]
        %v1781 = vld [vmem:[#allocation3 + $0x14] sm:$0xf]
        %v1782 = vld [vmem:[#allocation3 + $0x18] sm:$0xf]
        %v1783 = vld [vmem:[#allocation3 + $0x1c] sm:$0xf]
        %v1792 = vunpack.c.l.b16 %v1776
        %v1793 = vunpack.c.l.b16 %v1777
        %v1794 = vunpack.c.l.b16 %v1778
        %v1795 = vunpack.c.l.b16 %v1779
        %v1796 = vunpack.c.l.b16 %v1780
        %v1797 = vunpack.c.l.b16 %v1781
        %v1798 = vunpack.c.l.b16 %v1782
        %v1799 = vunpack.c.l.b16 %v1783
        %v1800 = vpack.c.b16 %v1793, %v1792
        %v1801 = vpack.c.b16 %v1795, %v1794
        %v1802 = vpack.c.b16 %v1797, %v1796
        %v1803 = vpack.c.b16 %v1799, %v1798
        %v1809 = vsel %vm1699, %v1772, 0
        %v1812 = vsel %vm1699, %v1773, 0
        %v1815 = vsel %vm1699, %v1774, 0
        %v1818 = vsel %vm1699, %v1775, 0
        %1820 = vmatprep.subr.bf16.mxu0 0
        %1821 = vmatpush1.bf16.msra.mxu0 0
        %1822 = vmatprep.subr.bf16.mxu0 0
        %1823 = vmatpush1.bf16.msra.mxu0 0
        %1824 = vmatprep.subr.bf16.mxu0 0
        %1825 = vmatpush1.bf16.msra.mxu0 0
        %1826 = vmatprep.subr.bf16.mxu0 0
        %1827 = vmatpush1.bf16.msra.mxu0 0
        %1828 = vmatprep.subr.bf16.mxu0 0
        %1829 = vmatpush1.bf16.msra.mxu0 %v1803
        %1830 = vmatprep.subr.bf16.mxu0 0
        %1831 = vmatpush1.bf16.msra.mxu0 %v1802
        %1832 = vmatprep.subr.bf16.mxu0 0
        %1833 = vmatpush1.bf16.msra.mxu0 %v1801
        %1834 = vmatprep.subr.bf16.mxu0 0
        %1835 = vmatpush1.bf16.msra.mxu0 %v1800
        %1836 = vmatprep.subr.bf16.mxu0 0
        %1837 = vmatpush2.bf16.msra.mxu0 0
        %1838 = vmatprep.subr.bf16.mxu0 0
        %1839 = vmatpush2.bf16.msra.mxu0 0
        %1840 = vmatprep.subr.bf16.mxu0 0
        %1841 = vmatpush2.bf16.msra.mxu0 0
        %1842 = vmatprep.subr.bf16.mxu0 0
        %1843 = vmatpush2.bf16.msra.mxu0 0
        %1844 = vmatprep.subr.bf16.mxu0 0
        %1845 = vmatpush2.bf16.msra.mxu0 0
        %1846 = vmatprep.subr.bf16.mxu0 0
        %1847 = vmatpush2.bf16.msra.mxu0 0
        %1848 = vmatprep.subr.bf16.mxu0 0
        %1849 = vmatpush2.bf16.msra.mxu0 0
        %1850 = vmatprep.subr.bf16.mxu0 0
        %1851 = vmatpush2.bf16.msra.mxu0 0
        %1852 = vmatprep.mubr.bf16.mxu0 0
        %1853 = vmatmul.mubr.bf16.gmra.mxu0 %v1809
        %v1854 = vpop.f32.mrf.mxu0
        %v1855 = vadd.f32 0.0, %v1854
        %v1856 = vpop.f32.mrf.mxu0
        %v1857 = vpop.f32.mrf.mxu0
        %v1858 = vadd.f32 0.0, %v1857
        %v1859 = vpop.f32.mrf.mxu0
        %1860 = vmatprep.mubr.bf16.mxu0 0
        %1861 = vmatmul.mubr.bf16.gmra.mxu0 %v1812
        %v1862 = vpop.f32.mrf.mxu0
        %v1863 = vadd.f32 0.0, %v1862
        %v1864 = vpop.f32.mrf.mxu0
        %v1865 = vpop.f32.mrf.mxu0
        %v1866 = vadd.f32 0.0, %v1865
        %v1867 = vpop.f32.mrf.mxu0
        %1868 = vmatprep.mubr.bf16.mxu0 0
        %1869 = vmatmul.mubr.bf16.gmra.mxu0 %v1815
        %v1870 = vpop.f32.mrf.mxu0
        %v1871 = vadd.f32 0.0, %v1870
        %v1872 = vpop.f32.mrf.mxu0
        %v1873 = vpop.f32.mrf.mxu0
        %v1874 = vadd.f32 0.0, %v1873
        %v1875 = vpop.f32.mrf.mxu0
        %1876 = vmatprep.mubr.bf16.mxu0 0
        %1877 = vmatmul.mubr.bf16.gmra.mxu0 %v1818
        %v1878 = vpop.f32.mrf.mxu0
        %v1879 = vadd.f32 0.0, %v1878
        %v1880 = vpop.f32.mrf.mxu0
        %v1881 = vpop.f32.mrf.mxu0
        %v1882 = vadd.f32 0.0, %v1881
        %v1883 = vpop.f32.mrf.mxu0
        %1884 = vdwg.mxu0
        %v1885 = vrcp.pop %v1750
        %v1886 = vrcp.pop %v1753
        %v1887 = vrcp.pop %v1756
        %v1888 = vrcp.pop %v1759
        %v1889 = vrcp.pop %v1762
        %v1890 = vrcp.pop %v1765
        %v1891 = vrcp.pop %v1768
        %v1892 = vrcp.pop %v1771
        %v1893 = vmul.f32 %v1855, %v1885
        %v1894 = vmul.f32 %v1858, %v1886
        %v1895 = vmul.f32 %v1863, %v1887
        %v1896 = vmul.f32 %v1866, %v1888
        %v1897 = vmul.f32 %v1871, %v1889
        %v1898 = vmul.f32 %v1874, %v1890
        %v1899 = vmul.f32 %v1879, %v1891
        %v1900 = vmul.f32 %v1882, %v1892
        %v1901 = vpack.c.bf16 %v1894, %v1893
        %v1902 = vpack.c.bf16 %v1896, %v1895
        %v1903 = vpack.c.bf16 %v1898, %v1897
        %v1904 = vpack.c.bf16 %v1900, %v1899
        %v1905 = vld [vmem:[#allocation12] sm:$0xf]
        %v1906 = vld [vmem:[#allocation12 + $0x4] sm:$0xf]
        %v1907 = vld [vmem:[#allocation12 + $0x8] sm:$0xf]
        %v1908 = vld [vmem:[#allocation12 + $0xc] sm:$0xf]
        %v1909 = vld [vmem:[#allocation12 + $0x10] sm:$0xf]
        %v1910 = vld [vmem:[#allocation12 + $0x14] sm:$0xf]
        %v1911 = vld [vmem:[#allocation12 + $0x18] sm:$0xf]
        %v1912 = vld [vmem:[#allocation12 + $0x1c] sm:$0xf]
        %v1913 = vld [vmem:[#allocation12 + $0x20] sm:$0xf]
        %v1914 = vld [vmem:[#allocation12 + $0x24] sm:$0xf]
        %v1915 = vld [vmem:[#allocation12 + $0x28] sm:$0xf]
        %v1916 = vld [vmem:[#allocation12 + $0x2c] sm:$0xf]
        %v1917 = vld [vmem:[#allocation12 + $0x30] sm:$0xf]
        %v1918 = vld [vmem:[#allocation12 + $0x34] sm:$0xf]
        %v1919 = vld [vmem:[#allocation12 + $0x38] sm:$0xf]
        %v1920 = vld [vmem:[#allocation12 + $0x3c] sm:$0xf]
        %v1921 = vmul.f32 %v1485, %v1570
        %v1922 = vmul.f32 %v1490, %v1571
        %v1923 = vmul.f32 %v1495, %v1572
        %v1924 = vmul.f32 %v1500, %v1573
        %v1925 = vmul.f32 %v1505, %v1574
        %v1926 = vmul.f32 %v1510, %v1575
        %v1927 = vmul.f32 %v1515, %v1576
        %v1928 = vmul.f32 %v1520, %v1577
        %s1929 = scalar_lea.vmem [#allocation2], 64
        %v1930 = vld [vmem:[%s1929] sm:$0xff]
        %v1931 = vld [vmem:[%s1929 + $0x8] sm:$0xff]
        %v1932 = vld [vmem:[%s1929 + $0x10] sm:$0xff]
        %v1933 = vld [vmem:[%s1929 + $0x18] sm:$0xff]
        %v1934 = vld [vmem:[%s1929 + $0x20] sm:$0xff]
        %v1935 = vld [vmem:[%s1929 + $0x28] sm:$0xff]
        %v1936 = vld [vmem:[%s1929 + $0x30] sm:$0xff]
        %v1937 = vld [vmem:[%s1929 + $0x38] sm:$0xff]
        %1938 = vmatprep.subr.mxu0 0.0
        %1939 = vmatpush1.xpose.msra.mxu0 0.0
        %1940 = vmatprep.subr.mxu0 0.0
        %1941 = vmatpush1.xpose.msra.mxu0 0.0
        %1942 = vmatprep.subr.mxu0 0.0
        %1943 = vmatpush1.xpose.msra.mxu0 0.0
        %1944 = vmatprep.subr.mxu0 0.0
        %1945 = vmatpush1.xpose.msra.mxu0 0.0
        %1946 = vmatprep.subr.mxu0 0.0
        %1947 = vmatpush1.xpose.msra.mxu0 0.0
        %1948 = vmatprep.subr.mxu0 0.0
        %1949 = vmatpush1.xpose.msra.mxu0 0.0
        %1950 = vmatprep.subr.mxu0 0.0
        %1951 = vmatpush1.xpose.msra.mxu0 0.0
        %1952 = vmatprep.subr.mxu0 0.0
        %1953 = vmatpush1.xpose.msra.mxu0 0.0
        %1954 = vmatprep.subr.mxu0 0.0
        %1955 = vmatpush1.xpose.msra.mxu0 %v1937
        %1956 = vmatprep.subr.mxu0 0.0
        %1957 = vmatpush1.xpose.msra.mxu0 %v1936
        %1958 = vmatprep.subr.mxu0 0.0
        %1959 = vmatpush1.xpose.msra.mxu0 %v1935
        %1960 = vmatprep.subr.mxu0 0.0
        %1961 = vmatpush1.xpose.msra.mxu0 %v1934
        %1962 = vmatprep.subr.mxu0 0.0
        %1963 = vmatpush1.xpose.msra.mxu0 %v1933
        %1964 = vmatprep.subr.mxu0 0.0
        %1965 = vmatpush1.xpose.msra.mxu0 %v1932
        %1966 = vmatprep.subr.mxu0 0.0
        %1967 = vmatpush1.xpose.msra.mxu0 %v1931
        %1968 = vmatprep.subr.mxu0 0.0
        %1969 = vmatpush1.xpose.msra.mxu0 %v1930
        %1970 = vmatprep.subr.mxu0 0.0
        %1971 = vmatpush2.xpose.msra.mxu0 0.0
        %1972 = vmatprep.subr.mxu0 0.0
        %1973 = vmatpush2.xpose.msra.mxu0 0.0
        %1974 = vmatprep.subr.mxu0 0.0
        %1975 = vmatpush2.xpose.msra.mxu0 0.0
        %1976 = vmatprep.subr.mxu0 0.0
        %1977 = vmatpush2.xpose.msra.mxu0 0.0
        %1978 = vmatprep.subr.mxu0 0.0
        %1979 = vmatpush2.xpose.msra.mxu0 0.0
        %1980 = vmatprep.subr.mxu0 0.0
        %1981 = vmatpush2.xpose.msra.mxu0 0.0
        %1982 = vmatprep.subr.mxu0 0.0
        %1983 = vmatpush2.xpose.msra.mxu0 0.0
        %1984 = vmatprep.subr.mxu0 0.0
        %1985 = vmatpush2.xpose.msra.mxu0 0.0
        %1986 = vmatprep.subr.mxu0 0.0
        %1987 = vmatpush2.xpose.msra.mxu0 0.0
        %1988 = vmatprep.subr.mxu0 0.0
        %1989 = vmatpush2.xpose.msra.mxu0 0.0
        %1990 = vmatprep.subr.mxu0 0.0
        %1991 = vmatpush2.xpose.msra.mxu0 0.0
        %1992 = vmatprep.subr.mxu0 0.0
        %1993 = vmatpush2.xpose.msra.mxu0 0.0
        %1994 = vmatprep.subr.mxu0 0.0
        %1995 = vmatpush2.xpose.msra.mxu0 0.0
        %1996 = vmatprep.subr.mxu0 0.0
        %1997 = vmatpush2.xpose.msra.mxu0 0.0
        %1998 = vmatprep.subr.mxu0 0.0
        %1999 = vmatpush2.xpose.msra.mxu0 0.0
        %2000 = vmatprep.subr.mxu0 0.0
        %2001 = vmatpush2.xpose.msra.mxu0 0.0
        %2002 = vmatprep.mubr.f32.mxu0 0.0
        %2003 = vmatmul.mubr.f32.gmra.mxu0 %v1921
        %v2004 = vpop.f32.mrf.mxu0
        %v2005 = vadd.f32 0.0, %v2004
        %v2006 = vpop.f32.mrf.mxu0
        %2007 = vmatprep.mubr.f32.mxu0 0.0
        %2008 = vmatmul.mubr.f32.gmra.mxu0 %v1922
        %v2009 = vpop.f32.mrf.mxu0
        %v2010 = vadd.f32 0.0, %v2009
        %v2011 = vpop.f32.mrf.mxu0
        %2012 = vmatprep.mubr.f32.mxu0 0.0
        %2013 = vmatmul.mubr.f32.gmra.mxu0 %v1923
        %v2014 = vpop.f32.mrf.mxu0
        %v2015 = vadd.f32 0.0, %v2014
        %v2016 = vpop.f32.mrf.mxu0
        %2017 = vmatprep.mubr.f32.mxu0 0.0
        %2018 = vmatmul.mubr.f32.gmra.mxu0 %v1924
        %v2019 = vpop.f32.mrf.mxu0
        %v2020 = vadd.f32 0.0, %v2019
        %v2021 = vpop.f32.mrf.mxu0
        %2022 = vmatprep.mubr.f32.mxu0 0.0
        %2023 = vmatmul.mubr.f32.gmra.mxu0 %v1925
        %v2024 = vpop.f32.mrf.mxu0
        %v2025 = vadd.f32 0.0, %v2024
        %v2026 = vpop.f32.mrf.mxu0
        %2027 = vmatprep.mubr.f32.mxu0 0.0
        %2028 = vmatmul.mubr.f32.gmra.mxu0 %v1926
        %v2029 = vpop.f32.mrf.mxu0
        %v2030 = vadd.f32 0.0, %v2029
        %v2031 = vpop.f32.mrf.mxu0
        %2032 = vmatprep.mubr.f32.mxu0 0.0
        %2033 = vmatmul.mubr.f32.gmra.mxu0 %v1927
        %v2034 = vpop.f32.mrf.mxu0
        %v2035 = vadd.f32 0.0, %v2034
        %v2036 = vpop.f32.mrf.mxu0
        %2037 = vmatprep.mubr.f32.mxu0 0.0
        %2038 = vmatmul.mubr.f32.gmra.mxu0 %v1928
        %v2039 = vpop.f32.mrf.mxu0
        %v2040 = vadd.f32 0.0, %v2039
        %v2041 = vpop.f32.mrf.mxu0
        %2042 = vdwg.mxu0
        %v2043 = vsel %vm1699, %v2005, -inf
        %2044 = vmax.xlane.f32.xlu0 %v2043
        %v2045 = vpop.xlane.xlu0 %2044
        %v2046 = vsel %vm1699, %v2010, -inf
        %2047 = vmax.xlane.f32.xlu0 %v2046
        %v2048 = vpop.xlane.xlu0 %2047
        %v2049 = vsel %vm1699, %v2015, -inf
        %2050 = vmax.xlane.f32.xlu0 %v2049
        %v2051 = vpop.xlane.xlu0 %2050
        %v2052 = vsel %vm1699, %v2020, -inf
        %2053 = vmax.xlane.f32.xlu0 %v2052
        %v2054 = vpop.xlane.xlu0 %2053
        %v2055 = vsel %vm1699, %v2025, -inf
        %2056 = vmax.xlane.f32.xlu0 %v2055
        %v2057 = vpop.xlane.xlu0 %2056
        %v2058 = vsel %vm1699, %v2030, -inf
        %2059 = vmax.xlane.f32.xlu0 %v2058
        %v2060 = vpop.xlane.xlu0 %2059
        %v2061 = vsel %vm1699, %v2035, -inf
        %2062 = vmax.xlane.f32.xlu0 %v2061
        %v2063 = vpop.xlane.xlu0 %2062
        %v2064 = vsel %vm1699, %v2040, -inf
        %2065 = vmax.xlane.f32.xlu0 %v2064
        %v2066 = vpop.xlane.xlu0 %2065
        %v2067 = vsub.f32 %v2005, %v2045
        %v2068 = vsub.f32 %v2010, %v2048
        %v2069 = vsub.f32 %v2015, %v2051
        %v2070 = vsub.f32 %v2020, %v2054
        %v2071 = vsub.f32 %v2025, %v2057
        %v2072 = vsub.f32 %v2030, %v2060
        %v2073 = vsub.f32 %v2035, %v2063
        %v2074 = vsub.f32 %v2040, %v2066
        %v2075 = vmul.f32 %v2067, 1.442695
        %v2076 = vpow.pop %v2075
        %v2077 = vmul.f32 %v2068, 1.442695
        %v2078 = vpow.pop %v2077
        %v2079 = vmul.f32 %v2069, 1.442695
        %v2080 = vpow.pop %v2079
        %v2081 = vmul.f32 %v2070, 1.442695
        %v2082 = vpow.pop %v2081
        %v2083 = vmul.f32 %v2071, 1.442695
        %v2084 = vpow.pop %v2083
        %v2085 = vmul.f32 %v2072, 1.442695
        %v2086 = vpow.pop %v2085
        %v2087 = vmul.f32 %v2073, 1.442695
        %v2088 = vpow.pop %v2087
        %v2089 = vmul.f32 %v2074, 1.442695
        %v2090 = vpow.pop %v2089
        %v2091 = vsel %vm1699, %v2076, 0.0
        %2092 = vadd.xlane.f32.xlu0 %v2091
        %v2093 = vpop.xlane.xlu0 %2092
        %v2094 = vsel %vm1699, %v2078, 0.0
        %2095 = vadd.xlane.f32.xlu0 %v2094
        %v2096 = vpop.xlane.xlu0 %2095
        %v2097 = vsel %vm1699, %v2080, 0.0
        %2098 = vadd.xlane.f32.xlu0 %v2097
        %v2099 = vpop.xlane.xlu0 %2098
        %v2100 = vsel %vm1699, %v2082, 0.0
        %2101 = vadd.xlane.f32.xlu0 %v2100
        %v2102 = vpop.xlane.xlu0 %2101
        %v2103 = vsel %vm1699, %v2084, 0.0
        %2104 = vadd.xlane.f32.xlu0 %v2103
        %v2105 = vpop.xlane.xlu0 %2104
        %v2106 = vsel %vm1699, %v2086, 0.0
        %2107 = vadd.xlane.f32.xlu0 %v2106
        %v2108 = vpop.xlane.xlu0 %2107
        %v2109 = vsel %vm1699, %v2088, 0.0
        %2110 = vadd.xlane.f32.xlu0 %v2109
        %v2111 = vpop.xlane.xlu0 %2110
        %v2112 = vsel %vm1699, %v2090, 0.0
        %2113 = vadd.xlane.f32.xlu0 %v2112
        %v2114 = vpop.xlane.xlu0 %2113
        %v2115 = vpack.c.bf16 %v2078, %v2076
        %v2116 = vpack.c.bf16 %v2082, %v2080
        %v2117 = vpack.c.bf16 %v2086, %v2084
        %v2118 = vpack.c.bf16 %v2090, %v2088
        %s2119 = scalar_lea.vmem [#allocation3], 32
        %v2120 = vld [vmem:[%s2119] sm:$0xf]
        %v2121 = vld [vmem:[%s2119 + $0x4] sm:$0xf]
        %v2122 = vld [vmem:[%s2119 + $0x8] sm:$0xf]
        %v2123 = vld [vmem:[%s2119 + $0xc] sm:$0xf]
        %v2124 = vld [vmem:[%s2119 + $0x10] sm:$0xf]
        %v2125 = vld [vmem:[%s2119 + $0x14] sm:$0xf]
        %v2126 = vld [vmem:[%s2119 + $0x18] sm:$0xf]
        %v2127 = vld [vmem:[%s2119 + $0x1c] sm:$0xf]
        %v2136 = vunpack.c.l.b16 %v2120
        %v2137 = vunpack.c.l.b16 %v2121
        %v2138 = vunpack.c.l.b16 %v2122
        %v2139 = vunpack.c.l.b16 %v2123
        %v2140 = vunpack.c.l.b16 %v2124
        %v2141 = vunpack.c.l.b16 %v2125
        %v2142 = vunpack.c.l.b16 %v2126
        %v2143 = vunpack.c.l.b16 %v2127
        %v2144 = vpack.c.b16 %v2137, %v2136
        %v2145 = vpack.c.b16 %v2139, %v2138
        %v2146 = vpack.c.b16 %v2141, %v2140
        %v2147 = vpack.c.b16 %v2143, %v2142
        %v2153 = vsel %vm1699, %v2115, 0
        %v2156 = vsel %vm1699, %v2116, 0
        %v2159 = vsel %vm1699, %v2117, 0
        %v2162 = vsel %vm1699, %v2118, 0
        %2164 = vmatprep.subr.bf16.mxu0 0
        %2165 = vmatpush1.bf16.msra.mxu0 0
        %2166 = vmatprep.subr.bf16.mxu0 0
        %2167 = vmatpush1.bf16.msra.mxu0 0
        %2168 = vmatprep.subr.bf16.mxu0 0
        %2169 = vmatpush1.bf16.msra.mxu0 0
        %2170 = vmatprep.subr.bf16.mxu0 0
        %2171 = vmatpush1.bf16.msra.mxu0 0
        %2172 = vmatprep.subr.bf16.mxu0 0
        %2173 = vmatpush1.bf16.msra.mxu0 %v2147
        %2174 = vmatprep.subr.bf16.mxu0 0
        %2175 = vmatpush1.bf16.msra.mxu0 %v2146
        %2176 = vmatprep.subr.bf16.mxu0 0
        %2177 = vmatpush1.bf16.msra.mxu0 %v2145
        %2178 = vmatprep.subr.bf16.mxu0 0
        %2179 = vmatpush1.bf16.msra.mxu0 %v2144
        %2180 = vmatprep.subr.bf16.mxu0 0
        %2181 = vmatpush2.bf16.msra.mxu0 0
        %2182 = vmatprep.subr.bf16.mxu0 0
        %2183 = vmatpush2.bf16.msra.mxu0 0
        %2184 = vmatprep.subr.bf16.mxu0 0
        %2185 = vmatpush2.bf16.msra.mxu0 0
        %2186 = vmatprep.subr.bf16.mxu0 0
        %2187 = vmatpush2.bf16.msra.mxu0 0
        %2188 = vmatprep.subr.bf16.mxu0 0
        %2189 = vmatpush2.bf16.msra.mxu0 0
        %2190 = vmatprep.subr.bf16.mxu0 0
        %2191 = vmatpush2.bf16.msra.mxu0 0
        %2192 = vmatprep.subr.bf16.mxu0 0
        %2193 = vmatpush2.bf16.msra.mxu0 0
        %2194 = vmatprep.subr.bf16.mxu0 0
        %2195 = vmatpush2.bf16.msra.mxu0 0
        %2196 = vmatprep.mubr.bf16.mxu0 0
        %2197 = vmatmul.mubr.bf16.gmra.mxu0 %v2153
        %v2198 = vpop.f32.mrf.mxu0
        %v2199 = vadd.f32 0.0, %v2198
        %v2200 = vpop.f32.mrf.mxu0
        %v2201 = vpop.f32.mrf.mxu0
        %v2202 = vadd.f32 0.0, %v2201
        %v2203 = vpop.f32.mrf.mxu0
        %2204 = vmatprep.mubr.bf16.mxu0 0
        %2205 = vmatmul.mubr.bf16.gmra.mxu0 %v2156
        %v2206 = vpop.f32.mrf.mxu0
        %v2207 = vadd.f32 0.0, %v2206
        %v2208 = vpop.f32.mrf.mxu0
        %v2209 = vpop.f32.mrf.mxu0
        %v2210 = vadd.f32 0.0, %v2209
        %v2211 = vpop.f32.mrf.mxu0
        %2212 = vmatprep.mubr.bf16.mxu0 0
        %2213 = vmatmul.mubr.bf16.gmra.mxu0 %v2159
        %v2214 = vpop.f32.mrf.mxu0
        %v2215 = vadd.f32 0.0, %v2214
        %v2216 = vpop.f32.mrf.mxu0
        %v2217 = vpop.f32.mrf.mxu0
        %v2218 = vadd.f32 0.0, %v2217
        %v2219 = vpop.f32.mrf.mxu0
        %2220 = vmatprep.mubr.bf16.mxu0 0
        %2221 = vmatmul.mubr.bf16.gmra.mxu0 %v2162
        %v2222 = vpop.f32.mrf.mxu0
        %v2223 = vadd.f32 0.0, %v2222
        %v2224 = vpop.f32.mrf.mxu0
        %v2225 = vpop.f32.mrf.mxu0
        %v2226 = vadd.f32 0.0, %v2225
        %v2227 = vpop.f32.mrf.mxu0
        %2228 = vdwg.mxu0
        %v2229 = vrcp.pop %v2093
        %v2230 = vrcp.pop %v2096
        %v2231 = vrcp.pop %v2099
        %v2232 = vrcp.pop %v2102
        %v2233 = vrcp.pop %v2105
        %v2234 = vrcp.pop %v2108
        %v2235 = vrcp.pop %v2111
        %v2236 = vrcp.pop %v2114
        %v2237 = vmul.f32 %v2199, %v2229
        %v2238 = vmul.f32 %v2202, %v2230
        %v2239 = vmul.f32 %v2207, %v2231
        %v2240 = vmul.f32 %v2210, %v2232
        %v2241 = vmul.f32 %v2215, %v2233
        %v2242 = vmul.f32 %v2218, %v2234
        %v2243 = vmul.f32 %v2223, %v2235
        %v2244 = vmul.f32 %v2226, %v2236
        %v2245 = vpack.c.bf16 %v2238, %v2237
        %v2246 = vpack.c.bf16 %v2240, %v2239
        %v2247 = vpack.c.bf16 %v2242, %v2241
        %v2248 = vpack.c.bf16 %v2244, %v2243
        %s2249 = scalar_lea.vmem [#allocation12], 64
        %v2250 = vld [vmem:[%s2249] sm:$0xf]
        %v2251 = vld [vmem:[%s2249 + $0x4] sm:$0xf]
        %v2252 = vld [vmem:[%s2249 + $0x8] sm:$0xf]
        %v2253 = vld [vmem:[%s2249 + $0xc] sm:$0xf]
        %v2254 = vld [vmem:[%s2249 + $0x10] sm:$0xf]
        %v2255 = vld [vmem:[%s2249 + $0x14] sm:$0xf]
        %v2256 = vld [vmem:[%s2249 + $0x18] sm:$0xf]
        %v2257 = vld [vmem:[%s2249 + $0x1c] sm:$0xf]
        %v2258 = vld [vmem:[%s2249 + $0x20] sm:$0xf]
        %v2259 = vld [vmem:[%s2249 + $0x24] sm:$0xf]
        %v2260 = vld [vmem:[%s2249 + $0x28] sm:$0xf]
        %v2261 = vld [vmem:[%s2249 + $0x2c] sm:$0xf]
        %v2262 = vld [vmem:[%s2249 + $0x30] sm:$0xf]
        %v2263 = vld [vmem:[%s2249 + $0x34] sm:$0xf]
        %v2264 = vld [vmem:[%s2249 + $0x38] sm:$0xf]
        %v2265 = vld [vmem:[%s2249 + $0x3c] sm:$0xf]
        %v2282 = vunpack.c.l.b16 %v2250
        %v2283 = vunpack.c.l.b16 %v2251
        %v2284 = vunpack.c.l.b16 %v2252
        %v2285 = vunpack.c.l.b16 %v2253
        %v2286 = vunpack.c.l.b16 %v2254
        %v2287 = vunpack.c.l.b16 %v2255
        %v2288 = vunpack.c.l.b16 %v2256
        %v2289 = vunpack.c.l.b16 %v2257
        %v2290 = vunpack.c.l.b16 %v2258
        %v2291 = vunpack.c.l.b16 %v2259
        %v2292 = vunpack.c.l.b16 %v2260
        %v2293 = vunpack.c.l.b16 %v2261
        %v2294 = vunpack.c.l.b16 %v2262
        %v2295 = vunpack.c.l.b16 %v2263
        %v2296 = vunpack.c.l.b16 %v2264
        %v2297 = vunpack.c.l.b16 %v2265
        %v2298 = vpack.c.b16 %v2283, %v2282
        %v2299 = vpack.c.b16 %v2285, %v2284
        %v2300 = vpack.c.b16 %v2287, %v2286
        %v2301 = vpack.c.b16 %v2289, %v2288
        %v2302 = vpack.c.b16 %v2291, %v2290
        %v2303 = vpack.c.b16 %v2293, %v2292
        %v2304 = vpack.c.b16 %v2295, %v2294
        %v2305 = vpack.c.b16 %v2297, %v2296
        %2314 = vmatprep.subr.bf16.mxu0 0
        %2315 = vmatpush1.bf16.msra.mxu0 %v2305
        %2316 = vmatprep.subr.bf16.mxu0 0
        %2317 = vmatpush1.bf16.msra.mxu0 %v2304
        %2318 = vmatprep.subr.bf16.mxu0 0
        %2319 = vmatpush1.bf16.msra.mxu0 %v2303
        %2320 = vmatprep.subr.bf16.mxu0 0
        %2321 = vmatpush1.bf16.msra.mxu0 %v2302
        %2322 = vmatprep.subr.bf16.mxu0 0
        %2323 = vmatpush1.bf16.msra.mxu0 %v2301
        %2324 = vmatprep.subr.bf16.mxu0 0
        %2325 = vmatpush1.bf16.msra.mxu0 %v2300
        %2326 = vmatprep.subr.bf16.mxu0 0
        %2327 = vmatpush1.bf16.msra.mxu0 %v2299
        %2328 = vmatprep.subr.bf16.mxu0 0
        %2329 = vmatpush1.bf16.msra.mxu0 %v2298
        %2330 = vmatprep.subr.bf16.mxu0 0
        %2331 = vmatpush2.bf16.msra.mxu0 0
        %2332 = vmatprep.subr.bf16.mxu0 0
        %2333 = vmatpush2.bf16.msra.mxu0 0
        %2334 = vmatprep.subr.bf16.mxu0 0
        %2335 = vmatpush2.bf16.msra.mxu0 0
        %2336 = vmatprep.subr.bf16.mxu0 0
        %2337 = vmatpush2.bf16.msra.mxu0 0
        %2338 = vmatprep.subr.bf16.mxu0 0
        %2339 = vmatpush2.bf16.msra.mxu0 0
        %2340 = vmatprep.subr.bf16.mxu0 0
        %2341 = vmatpush2.bf16.msra.mxu0 0
        %2342 = vmatprep.subr.bf16.mxu0 0
        %2343 = vmatpush2.bf16.msra.mxu0 0
        %2344 = vmatprep.subr.bf16.mxu0 0
        %2345 = vmatpush2.bf16.msra.mxu0 0
        %2346 = vmatprep.mubr.bf16.mxu0 0
        %2347 = vmatmul.mubr.bf16.gmra.mxu0 %v2245
        %v2348 = vpop.f32.mrf.mxu0
        %v2349 = vadd.f32 0.0, %v2348
        %v2350 = vpop.f32.mrf.mxu0
        %v2351 = vpop.f32.mrf.mxu0
        %v2352 = vadd.f32 0.0, %v2351
        %v2353 = vpop.f32.mrf.mxu0
        %2354 = vmatprep.mubr.bf16.mxu0 0
        %2355 = vmatmul.mubr.bf16.gmra.mxu0 %v2246
        %v2356 = vpop.f32.mrf.mxu0
        %v2357 = vadd.f32 0.0, %v2356
        %v2358 = vpop.f32.mrf.mxu0
        %v2359 = vpop.f32.mrf.mxu0
        %v2360 = vadd.f32 0.0, %v2359
        %v2361 = vpop.f32.mrf.mxu0
        %2362 = vmatprep.mubr.bf16.mxu0 0
        %2363 = vmatmul.mubr.bf16.gmra.mxu0 %v2247
        %v2364 = vpop.f32.mrf.mxu0
        %v2365 = vadd.f32 0.0, %v2364
        %v2366 = vpop.f32.mrf.mxu0
        %v2367 = vpop.f32.mrf.mxu0
        %v2368 = vadd.f32 0.0, %v2367
        %v2369 = vpop.f32.mrf.mxu0
        %2370 = vmatprep.mubr.bf16.mxu0 0
        %2371 = vmatmul.mubr.bf16.gmra.mxu0 %v2248
        %v2372 = vpop.f32.mrf.mxu0
        %v2373 = vadd.f32 0.0, %v2372
        %v2374 = vpop.f32.mrf.mxu0
        %v2375 = vpop.f32.mrf.mxu0
        %v2376 = vadd.f32 0.0, %v2375
        %v2377 = vpop.f32.mrf.mxu0
        %2378 = vdwg.mxu0
        %v2395 = vunpack.c.l.b16 %v1905
        %v2396 = vunpack.c.l.b16 %v1906
        %v2397 = vunpack.c.l.b16 %v1907
        %v2398 = vunpack.c.l.b16 %v1908
        %v2399 = vunpack.c.l.b16 %v1909
        %v2400 = vunpack.c.l.b16 %v1910
        %v2401 = vunpack.c.l.b16 %v1911
        %v2402 = vunpack.c.l.b16 %v1912
        %v2403 = vunpack.c.l.b16 %v1913
        %v2404 = vunpack.c.l.b16 %v1914
        %v2405 = vunpack.c.l.b16 %v1915
        %v2406 = vunpack.c.l.b16 %v1916
        %v2407 = vunpack.c.l.b16 %v1917
        %v2408 = vunpack.c.l.b16 %v1918
        %v2409 = vunpack.c.l.b16 %v1919
        %v2410 = vunpack.c.l.b16 %v1920
        %v2411 = vpack.c.b16 %v2396, %v2395
        %v2412 = vpack.c.b16 %v2398, %v2397
        %v2413 = vpack.c.b16 %v2400, %v2399
        %v2414 = vpack.c.b16 %v2402, %v2401
        %v2415 = vpack.c.b16 %v2404, %v2403
        %v2416 = vpack.c.b16 %v2406, %v2405
        %v2417 = vpack.c.b16 %v2408, %v2407
        %v2418 = vpack.c.b16 %v2410, %v2409
        %2427 = vmatprep.subr.bf16.mxu0 0
        %2428 = vmatpush1.bf16.msra.mxu0 %v2418
        %2429 = vmatprep.subr.bf16.mxu0 0
        %2430 = vmatpush1.bf16.msra.mxu0 %v2417
        %2431 = vmatprep.subr.bf16.mxu0 0
        %2432 = vmatpush1.bf16.msra.mxu0 %v2416
        %2433 = vmatprep.subr.bf16.mxu0 0
        %2434 = vmatpush1.bf16.msra.mxu0 %v2415
        %2435 = vmatprep.subr.bf16.mxu0 0
        %2436 = vmatpush1.bf16.msra.mxu0 %v2414
        %2437 = vmatprep.subr.bf16.mxu0 0
        %2438 = vmatpush1.bf16.msra.mxu0 %v2413
        %2439 = vmatprep.subr.bf16.mxu0 0
        %2440 = vmatpush1.bf16.msra.mxu0 %v2412
        %2441 = vmatprep.subr.bf16.mxu0 0
        %2442 = vmatpush1.bf16.msra.mxu0 %v2411
        %2443 = vmatprep.subr.bf16.mxu0 0
        %2444 = vmatpush2.bf16.msra.mxu0 0
        %2445 = vmatprep.subr.bf16.mxu0 0
        %2446 = vmatpush2.bf16.msra.mxu0 0
        %2447 = vmatprep.subr.bf16.mxu0 0
        %2448 = vmatpush2.bf16.msra.mxu0 0
        %2449 = vmatprep.subr.bf16.mxu0 0
        %2450 = vmatpush2.bf16.msra.mxu0 0
        %2451 = vmatprep.subr.bf16.mxu0 0
        %2452 = vmatpush2.bf16.msra.mxu0 0
        %2453 = vmatprep.subr.bf16.mxu0 0
        %2454 = vmatpush2.bf16.msra.mxu0 0
        %2455 = vmatprep.subr.bf16.mxu0 0
        %2456 = vmatpush2.bf16.msra.mxu0 0
        %2457 = vmatprep.subr.bf16.mxu0 0
        %2458 = vmatpush2.bf16.msra.mxu0 0
        %2459 = vmatprep.mubr.bf16.mxu0 0
        %2460 = vmatmul.mubr.bf16.gmra.mxu0 %v1901
        %v2461 = vpop.f32.mrf.mxu0
        %v2462 = vadd.f32 %v2349, %v2461
        %v2463 = vpop.f32.mrf.mxu0
        %v2464 = vpop.f32.mrf.mxu0
        %v2465 = vadd.f32 %v2352, %v2464
        %v2466 = vpop.f32.mrf.mxu0
        %2467 = vmatprep.mubr.bf16.mxu0 0
        %2468 = vmatmul.mubr.bf16.gmra.mxu0 %v1902
        %v2469 = vpop.f32.mrf.mxu0
        %v2470 = vadd.f32 %v2357, %v2469
        %v2471 = vpop.f32.mrf.mxu0
        %v2472 = vpop.f32.mrf.mxu0
        %v2473 = vadd.f32 %v2360, %v2472
        %v2474 = vpop.f32.mrf.mxu0
        %2475 = vmatprep.mubr.bf16.mxu0 0
        %2476 = vmatmul.mubr.bf16.gmra.mxu0 %v1903
        %v2477 = vpop.f32.mrf.mxu0
        %v2478 = vadd.f32 %v2365, %v2477
        %v2479 = vpop.f32.mrf.mxu0
        %v2480 = vpop.f32.mrf.mxu0
        %v2481 = vadd.f32 %v2368, %v2480
        %v2482 = vpop.f32.mrf.mxu0
        %2483 = vmatprep.mubr.bf16.mxu0 0
        %2484 = vmatmul.mubr.bf16.gmra.mxu0 %v1904
        %v2485 = vpop.f32.mrf.mxu0
        %v2486 = vadd.f32 %v2373, %v2485
        %v2487 = vpop.f32.mrf.mxu0
        %v2488 = vpop.f32.mrf.mxu0
        %v2489 = vadd.f32 %v2376, %v2488
        %v2490 = vpop.f32.mrf.mxu0
        %2491 = vdwg.mxu0
        %v2492 = vadd.f32 %v1209, %v2462
        %v2493 = vadd.f32 %v1210, %v2465
        %v2494 = vadd.f32 %v1211, %v2470
        %v2495 = vadd.f32 %v1212, %v2473
        %v2496 = vadd.f32 %v1213, %v2478
        %v2497 = vadd.f32 %v1214, %v2481
        %v2498 = vadd.f32 %v1215, %v2486
        %v2499 = vadd.f32 %v1216, %v2489
        %v2500 = vld [vmem:[%s8] sm:$0x1]
        %v2502 = vlaneseq
        %v2503 = vshrl.u32 %v2502, 7
        %v2504 = vsub.s32 0, %v2503
        %v2505 = vrot.slane %v2500, %v2504
        %v2507 = vadd.f32 %v2492, %v2505
        %v2508 = vadd.f32 %v2493, %v2505
        %v2509 = vadd.f32 %v2494, %v2505
        %v2510 = vadd.f32 %v2495, %v2505
        %v2511 = vadd.f32 %v2496, %v2505
        %v2512 = vadd.f32 %v2497, %v2505
        %v2513 = vadd.f32 %v2498, %v2505
        %v2514 = vadd.f32 %v2499, %v2505
        %2515 = vst [vmem:[%s422] sm:$0xff] %v2507
        %2516 = vst [vmem:[%s422 + $0x8] sm:$0xff] %v2508
        %2517 = vst [vmem:[%s422 + $0x10] sm:$0xff] %v2509
        %2518 = vst [vmem:[%s422 + $0x18] sm:$0xff] %v2510
        %2519 = vst [vmem:[%s422 + $0x20] sm:$0xff] %v2511
        %2520 = vst [vmem:[%s422 + $0x28] sm:$0xff] %v2512
        %2521 = vst [vmem:[%s422 + $0x30] sm:$0xff] %v2513
        %2522 = vst [vmem:[%s422 + $0x38] sm:$0xff] %v2514
        %s2523 = sand.u32 %s244, 1
        %s2524 = scalar_lea.sflag [#allocation6], %s2523
        %s2525 = sand.u32 %s244, 1
        %s2526 = smul.addr %s2525, 64
        %s2527 = scalar_lea.vmem [#allocation13], %s2526
        // Predicated region
        $region81: #{tpu_custom_call.1} parent=55 // pred_check
          %p2528 = pneg %p254
        $region82: #{tpu_custom_call.1} parent=55 // pred_check_branch
          %2530 = sbr.rel (%p2528) target = $region84
        $region83: #{tpu_custom_call.1} parent=55 // pred_region
          %s2531 = smul.u32 8, %s33
          %s2533 = ssub.s32 1024, 1024
          %2534 = vsyncadd %s2524, %s2533
          %s2535 = smul.addr %s32, 8
          %s2536 = sadd.s32 %s2531, %s2535
          %s2537 = smul.addr %s2536, 128
          %s2538 = scalar_lea.hbm %s9, %s2537
          %s2539 = sshll.u32 %s2527, 4
          %s2540 = int_to_ptr.vmem [resolvable:$true] %s2539
          %2545 = dma.vmem_to_hbm [thread:$0]  %s2540, 1024, %s2538, %s2524, 128, 128, 8
        $region84: #{tpu_custom_call.1} parent=55 // pred_fallthru
          _
      $region56: #{tpu_custom_call.1} parent=5 // pred_fallthru
        _
      %p2546 = scmp.le.s32.totalorder 2, %s23
      // Predicated region
      $region85: #{tpu_custom_call.1} parent=5 // pred_check
        %p2547 = pneg %p2546
      $region86: #{tpu_custom_call.1} parent=5 // pred_check_branch
        %2549 = sbr.rel (%p2547) target = $region88
      $region87: #{tpu_custom_call.1} parent=5 // pred_region
        %s2550 = ssub.s32 %s23, 2
        // Predicated region
        $region89: #{tpu_custom_call.1} parent=87 // pred_check
          %p2551 = pneg %p260
        $region90: #{tpu_custom_call.1} parent=87 // pred_check_branch
          %2553 = sbr.rel (%p2551) target = $region92
        $region91: #{tpu_custom_call.1} parent=87 // pred_region
          %s2554 = sand.u32 %s245, 1
          %s2555 = scalar_lea.sflag [#allocation6], %s2554
          %s2556 = sand.u32 %s245, 1
          %s2557 = smul.addr %s2556, 64
          %s2558 = scalar_lea.vmem [#allocation13], %s2557
          %2559 = dma.done %s2555, 1024
        $region92: #{tpu_custom_call.1} parent=87 // pred_fallthru
          _
      $region88: #{tpu_custom_call.1} parent=5 // pred_fallthru
        _
    $region6: #{tpu_custom_call.1} parent=1 // loop_footer
      %s27 = sadd.s32 1, %s23
    $region7: #{tpu_custom_call.1} parent=1 // loop_footer_branch
      %22 = sbr.rel target = $region3
    $region8: #{tpu_custom_call.1} parent=1 // loop_exit
      _
    %2560 = vsyncpa [#allocation5], 1
    %s2561 = scalar_lea.sflag [#allocation5], 1
    %2562 = vsyncpa %s2561, 1
    %2563 = vsyncpa [#allocation8], 1
    %2564 = vsyncpa [#allocation11], 1
    %2565 = vsyncpa [#allocation6], 1
    %s2566 = scalar_lea.sflag [#allocation6], 1
    %2567 = vsyncpa %s2566, 1

</llo_original>
